<compile_context>
chip_gen: v5e
topology: v5e:2x2
jax: 0.10.0
libtpu: 0.0.40
codegen_flags: <defaults>
</compile_context>

<pallas_src>
import functools

import jax
import jax.numpy as jnp
import numpy as np
from jax import lax
from jax.experimental import pallas as pl
from jax.experimental.pallas import tpu as pltpu


def _basic_block_kernel(x_ref, w1_ref, w2_ref, out_ref, *, H, W):
    # x_ref  : (B, C, H*W)   VMEM  activations, lane-dense (HW multiple of 128)
    # w1_ref : (1, C, C*9)   VMEM  conv1 weights, PyTorch OIHW flattened over (ci,ky,kx)
    # w2_ref : (1, C, C*9)   VMEM  conv2 weights
    # out_ref: (B, C, H*W)   VMEM
    B, C, HW = x_ref.shape

    x = x_ref[...]                      # loaded once; reused as identity residual
    w1 = w1_ref[...]
    w2 = w2_ref[...]

    # ---- boundary masks, hoisted once and shared by both convs --------------
    # flat lane index p = y*W + x  (per image; lane axis is exactly HW long, so
    # rolls never mix batch elements and any wrap-around lands on a masked row).
    p = lax.broadcasted_iota(jnp.int32, (1, 1, HW), 2)
    col = p % W
    row_ok = {-1: p >= W,            # y >= 1     (tap looks up,   dy = -1)
              0: None,
              1: p < (H - 1) * W}    # y <= H-2   (tap looks down, dy = +1)
    col_ok = {-1: col >= 1,          # x >= 1     (dx = -1)
              0: None,
              1: col <= W - 2}       # x <= W-2   (dx = +1)

    taps = []                        # (weight column offset, lane shift, mask)
    for ky in range(3):
        for kx in range(3):
            dy, dx = ky - 1, kx - 1
            r, c = row_ok[dy], col_ok[dx]
            if r is None:
                m = c
            elif c is None:
                m = r
            else:
                m = jnp.logical_and(r, c)
            taps.append((ky * 3 + kx, dy * W + dx, m))

    def conv3x3(h, w):
        """h: (B, C, HW) f32, w: (1, C, C*9).  Returns (B, C, HW) f32."""
        acc = jnp.zeros((B, C, HW), jnp.float32)
        for t, s, m in taps:
            # win[b, ci, p] = h[b, ci, p + s]   (zero outside the image)
            win = h if s == 0 else pltpu.roll(h, (-s) % HW, 2)   # jnp.roll semantics
            if m is not None:
                win = jnp.where(m, win, 0.0)
            for ci in range(C):
                colw = w[:, :, ci * 9 + t: ci * 9 + t + 1]       # (1, C, 1): all co at once
                acc = acc + colw * win[:, ci:ci + 1, :]
        return acc

    # conv1 -> (gn1 identity) -> ReLU; stays register-resident for conv2.
    h1 = jnp.maximum(conv3x3(x, w1), 0.0)
    # conv2 -> (gn2 identity) -> + identity shortcut -> ReLU; one full-slab store.
    out_ref[...] = jnp.maximum(conv3x3(h1, w2) + x, 0.0)
    # TODO(synk): group_norm=True branch (GroupNorm(4, C, affine=False)) and the
    # strided 1x1 projection shortcut (stride!=1 or in_planes!=planes) are not
    # needed for the default constructor config and are not implemented here.


def basic_block(x, w1, w2):
    """x: (B, C, H, W) f32.  w1, w2: (C, C, 3, 3) f32 in PyTorch OIHW order."""
    B, C, H, W = x.shape
    # Default config assumptions (identity shortcut): Cin == Cout, stride == 1.
    assert w1.shape == (C, C, 3, 3) and w2.shape == (C, C, 3, 3)
    HW = H * W

    kernel = functools.partial(_basic_block_kernel, H=H, W=W)
    out = pl.pallas_call(
        kernel,
        out_shape=jax.ShapeDtypeStruct((B, C, HW), jnp.float32),
        grid=(1,),
        in_specs=[
            pl.BlockSpec((B, C, HW), lambda i: (0, 0, 0)),
            pl.BlockSpec((1, C, C * 9), lambda i: (0, 0, 0)),
            pl.BlockSpec((1, C, C * 9), lambda i: (0, 0, 0)),
        ],
        out_specs=pl.BlockSpec((B, C, HW), lambda i: (0, 0, 0)),
        compiler_params=pltpu.CompilerParams(
            dimension_semantics=("arbitrary",)),  # single step; see header re v7x
    )(x.reshape(B, C, HW), w1.reshape(1, C, C * 9), w2.reshape(1, C, C * 9))
    return out.reshape(B, C, H, W)


def basic_block_reference(x, w1, w2):
    """Pure-JAX reference matching the PyTorch forward (default config)."""
    dn = ("NCHW", "OIHW", "NCHW")
    out = lax.conv_general_dilated(x, w1, (1, 1), "SAME", dimension_numbers=dn)
    out = jnp.maximum(out, 0.0)
    out = lax.conv_general_dilated(out, w2, (1, 1), "SAME", dimension_numbers=dn)
    return jnp.maximum(out + x, 0.0)


if __name__ == "__main__":
    B, C, H, W = 2, 4, 16, 16  # in_planes = planes = 4, stride = 1

    key = jax.random.PRNGKey(0)
    kx, k1, k2 = jax.random.split(key, 3)
    x = jax.random.normal(kx, (B, C, H, W), dtype=jnp.float32)
    # Deterministic synthetic weights, PyTorch Conv2d weight shape (out, in, kh, kw).
    w1 = 0.1 * jax.random.normal(k1, (C, C, 3, 3), dtype=jnp.float32)
    w2 = 0.1 * jax.random.normal(k2, (C, C, 3, 3), dtype=jnp.float32)

    out = jax.block_until_ready(basic_block(x, w1, w2))
    ref = jax.block_until_ready(basic_block_reference(x, w1, w2))

    np.testing.assert_allclose(np.asarray(out), np.asarray(ref), rtol=1e-4, atol=1e-5)
    print("KERNEL_OK")
</pallas_src>

<mosaic_0001>
module attributes {stable_mosaic.version = 11 : i64} {
  func.func @_basic_block_kernel(%arg0: i32, %arg1: memref<2x4x256xf32, #tpu.memory_space<vmem>>, %arg2: memref<1x4x36xf32, #tpu.memory_space<vmem>>, %arg3: memref<1x4x36xf32, #tpu.memory_space<vmem>>, %arg4: memref<2x4x256xf32, #tpu.memory_space<vmem>>) attributes {dimension_semantics = [#tpu.dimension_semantics<arbitrary>], iteration_bounds = array<i64: 1>, scalar_prefetch = 0 : i64, scratch_operands = 0 : i64, tpu.core_type = #tpu.core_type<tc>, window_params = [{pipeline_mode = #tpu.pipeline_mode<synchronous>, transform_indices = @transform_0, window_bounds = array<i64: 2, 4, 256>}, {pipeline_mode = #tpu.pipeline_mode<synchronous>, transform_indices = @transform_1, window_bounds = array<i64: 1, 4, 36>}, {pipeline_mode = #tpu.pipeline_mode<synchronous>, transform_indices = @transform_2, window_bounds = array<i64: 1, 4, 36>}, {pipeline_mode = #tpu.pipeline_mode<synchronous>, transform_indices = @transform_3, window_bounds = array<i64: 2, 4, 256>}]} {
    %c0 = arith.constant 0 : index
    %c0_0 = arith.constant 0 : index
    %c0_1 = arith.constant 0 : index
    %0 = vector.load %arg1[%c0, %c0_0, %c0_1] : memref<2x4x256xf32, #tpu.memory_space<vmem>>, vector<2x4x256xf32>
    %c0_2 = arith.constant 0 : index
    %c0_3 = arith.constant 0 : index
    %c0_4 = arith.constant 0 : index
    %1 = vector.load %arg2[%c0_2, %c0_3, %c0_4] : memref<1x4x36xf32, #tpu.memory_space<vmem>>, vector<1x4x36xf32>
    %c0_5 = arith.constant 0 : index
    %c0_6 = arith.constant 0 : index
    %c0_7 = arith.constant 0 : index
    %2 = vector.load %arg3[%c0_5, %c0_6, %c0_7] : memref<1x4x36xf32, #tpu.memory_space<vmem>>, vector<1x4x36xf32>
    %3 = tpu.iota {dimensions = array<i32: 2>} : vector<1x1x256xi32>
    %c16_i32 = arith.constant 16 : i32
    %c0_i32 = arith.constant 0 : i32
    %4 = arith.cmpi eq, %c16_i32, %c0_i32 : i32
    %c1_i32 = arith.constant 1 : i32
    %5 = arith.select %4, %c1_i32, %c16_i32 : i32
    %6 = vector.broadcast %5 : i32 to vector<1x1x256xi32>
    %7 = arith.remsi %3, %6 : vector<1x1x256xi32>
    %c0_i32_8 = arith.constant 0 : i32
    %8 = vector.broadcast %c0_i32_8 : i32 to vector<1x1x256xi32>
    %9 = arith.cmpi ne, %7, %8 : vector<1x1x256xi32>
    %c0_i32_9 = arith.constant 0 : i32
    %10 = vector.broadcast %c0_i32_9 : i32 to vector<1x1x256xi32>
    %11 = arith.cmpi slt, %7, %10 : vector<1x1x256xi32>
    %c0_i32_10 = arith.constant 0 : i32
    %12 = arith.cmpi slt, %5, %c0_i32_10 : i32
    %13 = vector.broadcast %12 : i1 to vector<1x1x256xi1>
    %14 = vector.broadcast %13 : vector<1x1x256xi1> to vector<1x1x256xi1>
    %15 = arith.xori %11, %14 : vector<1x1x256xi1>
    %16 = arith.andi %15, %9 : vector<1x1x256xi1>
    %17 = vector.broadcast %5 : i32 to vector<1x1x256xi32>
    %18 = arith.addi %7, %17 : vector<1x1x256xi32>
    %19 = arith.select %16, %18, %7 : vector<1x1x256xi1>, vector<1x1x256xi32>
    %c16_i32_11 = arith.constant 16 : i32
    %20 = vector.broadcast %c16_i32_11 : i32 to vector<1x1x256xi32>
    %21 = arith.cmpi sge, %3, %20 : vector<1x1x256xi32>
    %c240_i32 = arith.constant 240 : i32
    %22 = vector.broadcast %c240_i32 : i32 to vector<1x1x256xi32>
    %23 = arith.cmpi slt, %3, %22 : vector<1x1x256xi32>
    %c1_i32_12 = arith.constant 1 : i32
    %24 = vector.broadcast %c1_i32_12 : i32 to vector<1x1x256xi32>
    %25 = arith.cmpi sge, %19, %24 : vector<1x1x256xi32>
    %c14_i32 = arith.constant 14 : i32
    %26 = vector.broadcast %c14_i32 : i32 to vector<1x1x256xi32>
    %27 = arith.cmpi sle, %19, %26 : vector<1x1x256xi32>
    %28 = arith.andi %21, %25 : vector<1x1x256xi1>
    %29 = arith.andi %21, %27 : vector<1x1x256xi1>
    %30 = arith.andi %23, %25 : vector<1x1x256xi1>
    %31 = arith.andi %23, %27 : vector<1x1x256xi1>
    %cst = arith.constant 0.000000e+00 : f32
    %32 = vector.broadcast %cst : f32 to vector<2x4x256xf32>
    %c17_i32 = arith.constant 17 : i32
    %33 = tpu.dynamic_rotate %0 by %c17_i32 dim 2 : vector<2x4x256xf32>, i32 -> vector<2x4x256xf32>
    %cst_13 = arith.constant 0.000000e+00 : f32
    %34 = vector.shape_cast %28 : vector<1x1x256xi1> to vector<1x1x256xi1>
    %35 = vector.broadcast %34 : vector<1x1x256xi1> to vector<2x4x256xi1>
    %36 = vector.broadcast %cst_13 : f32 to vector<2x4x256xf32>
    %37 = arith.select %35, %33, %36 : vector<2x4x256xi1>, vector<2x4x256xf32>
    %38 = vector.extract_strided_slice %1 {offsets = [0, 0, 0], sizes = [1, 4, 1], strides = [1, 1, 1]} : vector<1x4x36xf32> to vector<1x4x1xf32>
    %39 = vector.extract_strided_slice %37 {offsets = [0, 0, 0], sizes = [2, 1, 256], strides = [1, 1, 1]} : vector<2x4x256xf32> to vector<2x1x256xf32>
    %40 = vector.broadcast %38 : vector<1x4x1xf32> to vector<2x4x256xf32>
    %41 = vector.broadcast %39 : vector<2x1x256xf32> to vector<2x4x256xf32>
    %42 = arith.mulf %40, %41 : vector<2x4x256xf32>
    %43 = arith.addf %32, %42 : vector<2x4x256xf32>
    %44 = vector.extract_strided_slice %1 {offsets = [0, 0, 9], sizes = [1, 4, 1], strides = [1, 1, 1]} : vector<1x4x36xf32> to vector<1x4x1xf32>
    %45 = vector.extract_strided_slice %37 {offsets = [0, 1, 0], sizes = [2, 1, 256], strides = [1, 1, 1]} : vector<2x4x256xf32> to vector<2x1x256xf32>
    %46 = vector.broadcast %44 : vector<1x4x1xf32> to vector<2x4x256xf32>
    %47 = vector.broadcast %45 : vector<2x1x256xf32> to vector<2x4x256xf32>
    %48 = arith.mulf %46, %47 : vector<2x4x256xf32>
    %49 = arith.addf %43, %48 : vector<2x4x256xf32>
    %50 = vector.extract_strided_slice %1 {offsets = [0, 0, 18], sizes = [1, 4, 1], strides = [1, 1, 1]} : vector<1x4x36xf32> to vector<1x4x1xf32>
    %51 = vector.extract_strided_slice %37 {offsets = [0, 2, 0], sizes = [2, 1, 256], strides = [1, 1, 1]} : vector<2x4x256xf32> to vector<2x1x256xf32>
    %52 = vector.broadcast %50 : vector<1x4x1xf32> to vector<2x4x256xf32>
    %53 = vector.broadcast %51 : vector<2x1x256xf32> to vector<2x4x256xf32>
    %54 = arith.mulf %52, %53 : vector<2x4x256xf32>
    %55 = arith.addf %49, %54 : vector<2x4x256xf32>
    %56 = vector.extract_strided_slice %1 {offsets = [0, 0, 27], sizes = [1, 4, 1], strides = [1, 1, 1]} : vector<1x4x36xf32> to vector<1x4x1xf32>
    %57 = vector.extract_strided_slice %37 {offsets = [0, 3, 0], sizes = [2, 1, 256], strides = [1, 1, 1]} : vector<2x4x256xf32> to vector<2x1x256xf32>
    %58 = vector.broadcast %56 : vector<1x4x1xf32> to vector<2x4x256xf32>
    %59 = vector.broadcast %57 : vector<2x1x256xf32> to vector<2x4x256xf32>
    %60 = arith.mulf %58, %59 : vector<2x4x256xf32>
    %61 = arith.addf %55, %60 : vector<2x4x256xf32>
    %c16_i32_14 = arith.constant 16 : i32
    %62 = tpu.dynamic_rotate %0 by %c16_i32_14 dim 2 : vector<2x4x256xf32>, i32 -> vector<2x4x256xf32>
    %cst_15 = arith.constant 0.000000e+00 : f32
    %63 = vector.shape_cast %21 : vector<1x1x256xi1> to vector<1x1x256xi1>
    %64 = vector.broadcast %63 : vector<1x1x256xi1> to vector<2x4x256xi1>
    %65 = vector.broadcast %cst_15 : f32 to vector<2x4x256xf32>
    %66 = arith.select %64, %62, %65 : vector<2x4x256xi1>, vector<2x4x256xf32>
    %67 = vector.extract_strided_slice %1 {offsets = [0, 0, 1], sizes = [1, 4, 1], strides = [1, 1, 1]} : vector<1x4x36xf32> to vector<1x4x1xf32>
    %68 = vector.extract_strided_slice %66 {offsets = [0, 0, 0], sizes = [2, 1, 256], strides = [1, 1, 1]} : vector<2x4x256xf32> to vector<2x1x256xf32>
    %69 = vector.broadcast %67 : vector<1x4x1xf32> to vector<2x4x256xf32>
    %70 = vector.broadcast %68 : vector<2x1x256xf32> to vector<2x4x256xf32>
    %71 = arith.mulf %69, %70 : vector<2x4x256xf32>
    %72 = arith.addf %61, %71 : vector<2x4x256xf32>
    %73 = vector.extract_strided_slice %1 {offsets = [0, 0, 10], sizes = [1, 4, 1], strides = [1, 1, 1]} : vector<1x4x36xf32> to vector<1x4x1xf32>
    %74 = vector.extract_strided_slice %66 {offsets = [0, 1, 0], sizes = [2, 1, 256], strides = [1, 1, 1]} : vector<2x4x256xf32> to vector<2x1x256xf32>
    %75 = vector.broadcast %73 : vector<1x4x1xf32> to vector<2x4x256xf32>
    %76 = vector.broadcast %74 : vector<2x1x256xf32> to vector<2x4x256xf32>
    %77 = arith.mulf %75, %76 : vector<2x4x256xf32>
    %78 = arith.addf %72, %77 : vector<2x4x256xf32>
    %79 = vector.extract_strided_slice %1 {offsets = [0, 0, 19], sizes = [1, 4, 1], strides = [1, 1, 1]} : vector<1x4x36xf32> to vector<1x4x1xf32>
    %80 = vector.extract_strided_slice %66 {offsets = [0, 2, 0], sizes = [2, 1, 256], strides = [1, 1, 1]} : vector<2x4x256xf32> to vector<2x1x256xf32>
    %81 = vector.broadcast %79 : vector<1x4x1xf32> to vector<2x4x256xf32>
    %82 = vector.broadcast %80 : vector<2x1x256xf32> to vector<2x4x256xf32>
    %83 = arith.mulf %81, %82 : vector<2x4x256xf32>
    %84 = arith.addf %78, %83 : vector<2x4x256xf32>
    %85 = vector.extract_strided_slice %1 {offsets = [0, 0, 28], sizes = [1, 4, 1], strides = [1, 1, 1]} : vector<1x4x36xf32> to vector<1x4x1xf32>
    %86 = vector.extract_strided_slice %66 {offsets = [0, 3, 0], sizes = [2, 1, 256], strides = [1, 1, 1]} : vector<2x4x256xf32> to vector<2x1x256xf32>
    %87 = vector.broadcast %85 : vector<1x4x1xf32> to vector<2x4x256xf32>
    %88 = vector.broadcast %86 : vector<2x1x256xf32> to vector<2x4x256xf32>
    %89 = arith.mulf %87, %88 : vector<2x4x256xf32>
    %90 = arith.addf %84, %89 : vector<2x4x256xf32>
    %c15_i32 = arith.constant 15 : i32
    %91 = tpu.dynamic_rotate %0 by %c15_i32 dim 2 : vector<2x4x256xf32>, i32 -> vector<2x4x256xf32>
    %cst_16 = arith.constant 0.000000e+00 : f32
    %92 = vector.shape_cast %29 : vector<1x1x256xi1> to vector<1x1x256xi1>
    %93 = vector.broadcast %92 : vector<1x1x256xi1> to vector<2x4x256xi1>
    %94 = vector.broadcast %cst_16 : f32 to vector<2x4x256xf32>
    %95 = arith.select %93, %91, %94 : vector<2x4x256xi1>, vector<2x4x256xf32>
    %96 = vector.extract_strided_slice %1 {offsets = [0, 0, 2], sizes = [1, 4, 1], strides = [1, 1, 1]} : vector<1x4x36xf32> to vector<1x4x1xf32>
    %97 = vector.extract_strided_slice %95 {offsets = [0, 0, 0], sizes = [2, 1, 256], strides = [1, 1, 1]} : vector<2x4x256xf32> to vector<2x1x256xf32>
    %98 = vector.broadcast %96 : vector<1x4x1xf32> to vector<2x4x256xf32>
    %99 = vector.broadcast %97 : vector<2x1x256xf32> to vector<2x4x256xf32>
    %100 = arith.mulf %98, %99 : vector<2x4x256xf32>
    %101 = arith.addf %90, %100 : vector<2x4x256xf32>
    %102 = vector.extract_strided_slice %1 {offsets = [0, 0, 11], sizes = [1, 4, 1], strides = [1, 1, 1]} : vector<1x4x36xf32> to vector<1x4x1xf32>
    %103 = vector.extract_strided_slice %95 {offsets = [0, 1, 0], sizes = [2, 1, 256], strides = [1, 1, 1]} : vector<2x4x256xf32> to vector<2x1x256xf32>
    %104 = vector.broadcast %102 : vector<1x4x1xf32> to vector<2x4x256xf32>
    %105 = vector.broadcast %103 : vector<2x1x256xf32> to vector<2x4x256xf32>
    %106 = arith.mulf %104, %105 : vector<2x4x256xf32>
    %107 = arith.addf %101, %106 : vector<2x4x256xf32>
    %108 = vector.extract_strided_slice %1 {offsets = [0, 0, 20], sizes = [1, 4, 1], strides = [1, 1, 1]} : vector<1x4x36xf32> to vector<1x4x1xf32>
    %109 = vector.extract_strided_slice %95 {offsets = [0, 2, 0], sizes = [2, 1, 256], strides = [1, 1, 1]} : vector<2x4x256xf32> to vector<2x1x256xf32>
    %110 = vector.broadcast %108 : vector<1x4x1xf32> to vector<2x4x256xf32>
    %111 = vector.broadcast %109 : vector<2x1x256xf32> to vector<2x4x256xf32>
    %112 = arith.mulf %110, %111 : vector<2x4x256xf32>
    %113 = arith.addf %107, %112 : vector<2x4x256xf32>
    %114 = vector.extract_strided_slice %1 {offsets = [0, 0, 29], sizes = [1, 4, 1], strides = [1, 1, 1]} : vector<1x4x36xf32> to vector<1x4x1xf32>
    %115 = vector.extract_strided_slice %95 {offsets = [0, 3, 0], sizes = [2, 1, 256], strides = [1, 1, 1]} : vector<2x4x256xf32> to vector<2x1x256xf32>
    %116 = vector.broadcast %114 : vector<1x4x1xf32> to vector<2x4x256xf32>
    %117 = vector.broadcast %115 : vector<2x1x256xf32> to vector<2x4x256xf32>
    %118 = arith.mulf %116, %117 : vector<2x4x256xf32>
    %119 = arith.addf %113, %118 : vector<2x4x256xf32>
    %c1_i32_17 = arith.constant 1 : i32
    %120 = tpu.dynamic_rotate %0 by %c1_i32_17 dim 2 : vector<2x4x256xf32>, i32 -> vector<2x4x256xf32>
    %cst_18 = arith.constant 0.000000e+00 : f32
    %121 = vector.shape_cast %25 : vector<1x1x256xi1> to vector<1x1x256xi1>
    %122 = vector.broadcast %121 : vector<1x1x256xi1> to vector<2x4x256xi1>
    %123 = vector.broadcast %cst_18 : f32 to vector<2x4x256xf32>
    %124 = arith.select %122, %120, %123 : vector<2x4x256xi1>, vector<2x4x256xf32>
    %125 = vector.extract_strided_slice %1 {offsets = [0, 0, 3], sizes = [1, 4, 1], strides = [1, 1, 1]} : vector<1x4x36xf32> to vector<1x4x1xf32>
    %126 = vector.extract_strided_slice %124 {offsets = [0, 0, 0], sizes = [2, 1, 256], strides = [1, 1, 1]} : vector<2x4x256xf32> to vector<2x1x256xf32>
    %127 = vector.broadcast %125 : vector<1x4x1xf32> to vector<2x4x256xf32>
    %128 = vector.broadcast %126 : vector<2x1x256xf32> to vector<2x4x256xf32>
    %129 = arith.mulf %127, %128 : vector<2x4x256xf32>
    %130 = arith.addf %119, %129 : vector<2x4x256xf32>
    %131 = vector.extract_strided_slice %1 {offsets = [0, 0, 12], sizes = [1, 4, 1], strides = [1, 1, 1]} : vector<1x4x36xf32> to vector<1x4x1xf32>
    %132 = vector.extract_strided_slice %124 {offsets = [0, 1, 0], sizes = [2, 1, 256], strides = [1, 1, 1]} : vector<2x4x256xf32> to vector<2x1x256xf32>
    %133 = vector.broadcast %131 : vector<1x4x1xf32> to vector<2x4x256xf32>
    %134 = vector.broadcast %132 : vector<2x1x256xf32> to vector<2x4x256xf32>
    %135 = arith.mulf %133, %134 : vector<2x4x256xf32>
    %136 = arith.addf %130, %135 : vector<2x4x256xf32>
    %137 = vector.extract_strided_slice %1 {offsets = [0, 0, 21], sizes = [1, 4, 1], strides = [1, 1, 1]} : vector<1x4x36xf32> to vector<1x4x1xf32>
    %138 = vector.extract_strided_slice %124 {offsets = [0, 2, 0], sizes = [2, 1, 256], strides = [1, 1, 1]} : vector<2x4x256xf32> to vector<2x1x256xf32>
    %139 = vector.broadcast %137 : vector<1x4x1xf32> to vector<2x4x256xf32>
    %140 = vector.broadcast %138 : vector<2x1x256xf32> to vector<2x4x256xf32>
    %141 = arith.mulf %139, %140 : vector<2x4x256xf32>
    %142 = arith.addf %136, %141 : vector<2x4x256xf32>
    %143 = vector.extract_strided_slice %1 {offsets = [0, 0, 30], sizes = [1, 4, 1], strides = [1, 1, 1]} : vector<1x4x36xf32> to vector<1x4x1xf32>
    %144 = vector.extract_strided_slice %124 {offsets = [0, 3, 0], sizes = [2, 1, 256], strides = [1, 1, 1]} : vector<2x4x256xf32> to vector<2x1x256xf32>
    %145 = vector.broadcast %143 : vector<1x4x1xf32> to vector<2x4x256xf32>
    %146 = vector.broadcast %144 : vector<2x1x256xf32> to vector<2x4x256xf32>
    %147 = arith.mulf %145, %146 : vector<2x4x256xf32>
    %148 = arith.addf %142, %147 : vector<2x4x256xf32>
    %149 = vector.extract_strided_slice %1 {offsets = [0, 0, 4], sizes = [1, 4, 1], strides = [1, 1, 1]} : vector<1x4x36xf32> to vector<1x4x1xf32>
    %150 = vector.extract_strided_slice %0 {offsets = [0, 0, 0], sizes = [2, 1, 256], strides = [1, 1, 1]} : vector<2x4x256xf32> to vector<2x1x256xf32>
    %151 = vector.broadcast %149 : vector<1x4x1xf32> to vector<2x4x256xf32>
    %152 = vector.broadcast %150 : vector<2x1x256xf32> to vector<2x4x256xf32>
    %153 = arith.mulf %151, %152 : vector<2x4x256xf32>
    %154 = arith.addf %148, %153 : vector<2x4x256xf32>
    %155 = vector.extract_strided_slice %1 {offsets = [0, 0, 13], sizes = [1, 4, 1], strides = [1, 1, 1]} : vector<1x4x36xf32> to vector<1x4x1xf32>
    %156 = vector.extract_strided_slice %0 {offsets = [0, 1, 0], sizes = [2, 1, 256], strides = [1, 1, 1]} : vector<2x4x256xf32> to vector<2x1x256xf32>
    %157 = vector.broadcast %155 : vector<1x4x1xf32> to vector<2x4x256xf32>
    %158 = vector.broadcast %156 : vector<2x1x256xf32> to vector<2x4x256xf32>
    %159 = arith.mulf %157, %158 : vector<2x4x256xf32>
    %160 = arith.addf %154, %159 : vector<2x4x256xf32>
    %161 = vector.extract_strided_slice %1 {offsets = [0, 0, 22], sizes = [1, 4, 1], strides = [1, 1, 1]} : vector<1x4x36xf32> to vector<1x4x1xf32>
    %162 = vector.extract_strided_slice %0 {offsets = [0, 2, 0], sizes = [2, 1, 256], strides = [1, 1, 1]} : vector<2x4x256xf32> to vector<2x1x256xf32>
    %163 = vector.broadcast %161 : vector<1x4x1xf32> to vector<2x4x256xf32>
    %164 = vector.broadcast %162 : vector<2x1x256xf32> to vector<2x4x256xf32>
    %165 = arith.mulf %163, %164 : vector<2x4x256xf32>
    %166 = arith.addf %160, %165 : vector<2x4x256xf32>
    %167 = vector.extract_strided_slice %1 {offsets = [0, 0, 31], sizes = [1, 4, 1], strides = [1, 1, 1]} : vector<1x4x36xf32> to vector<1x4x1xf32>
    %168 = vector.extract_strided_slice %0 {offsets = [0, 3, 0], sizes = [2, 1, 256], strides = [1, 1, 1]} : vector<2x4x256xf32> to vector<2x1x256xf32>
    %169 = vector.broadcast %167 : vector<1x4x1xf32> to vector<2x4x256xf32>
    %170 = vector.broadcast %168 : vector<2x1x256xf32> to vector<2x4x256xf32>
    %171 = arith.mulf %169, %170 : vector<2x4x256xf32>
    %172 = arith.addf %166, %171 : vector<2x4x256xf32>
    %c255_i32 = arith.constant 255 : i32
    %173 = tpu.dynamic_rotate %0 by %c255_i32 dim 2 : vector<2x4x256xf32>, i32 -> vector<2x4x256xf32>
    %cst_19 = arith.constant 0.000000e+00 : f32
    %174 = vector.shape_cast %27 : vector<1x1x256xi1> to vector<1x1x256xi1>
    %175 = vector.broadcast %174 : vector<1x1x256xi1> to vector<2x4x256xi1>
    %176 = vector.broadcast %cst_19 : f32 to vector<2x4x256xf32>
    %177 = arith.select %175, %173, %176 : vector<2x4x256xi1>, vector<2x4x256xf32>
    %178 = vector.extract_strided_slice %1 {offsets = [0, 0, 5], sizes = [1, 4, 1], strides = [1, 1, 1]} : vector<1x4x36xf32> to vector<1x4x1xf32>
    %179 = vector.extract_strided_slice %177 {offsets = [0, 0, 0], sizes = [2, 1, 256], strides = [1, 1, 1]} : vector<2x4x256xf32> to vector<2x1x256xf32>
    %180 = vector.broadcast %178 : vector<1x4x1xf32> to vector<2x4x256xf32>
    %181 = vector.broadcast %179 : vector<2x1x256xf32> to vector<2x4x256xf32>
    %182 = arith.mulf %180, %181 : vector<2x4x256xf32>
    %183 = arith.addf %172, %182 : vector<2x4x256xf32>
    %184 = vector.extract_strided_slice %1 {offsets = [0, 0, 14], sizes = [1, 4, 1], strides = [1, 1, 1]} : vector<1x4x36xf32> to vector<1x4x1xf32>
    %185 = vector.extract_strided_slice %177 {offsets = [0, 1, 0], sizes = [2, 1, 256], strides = [1, 1, 1]} : vector<2x4x256xf32> to vector<2x1x256xf32>
    %186 = vector.broadcast %184 : vector<1x4x1xf32> to vector<2x4x256xf32>
    %187 = vector.broadcast %185 : vector<2x1x256xf32> to vector<2x4x256xf32>
    %188 = arith.mulf %186, %187 : vector<2x4x256xf32>
    %189 = arith.addf %183, %188 : vector<2x4x256xf32>
    %190 = vector.extract_strided_slice %1 {offsets = [0, 0, 23], sizes = [1, 4, 1], strides = [1, 1, 1]} : vector<1x4x36xf32> to vector<1x4x1xf32>
    %191 = vector.extract_strided_slice %177 {offsets = [0, 2, 0], sizes = [2, 1, 256], strides = [1, 1, 1]} : vector<2x4x256xf32> to vector<2x1x256xf32>
    %192 = vector.broadcast %190 : vector<1x4x1xf32> to vector<2x4x256xf32>
    %193 = vector.broadcast %191 : vector<2x1x256xf32> to vector<2x4x256xf32>
    %194 = arith.mulf %192, %193 : vector<2x4x256xf32>
    %195 = arith.addf %189, %194 : vector<2x4x256xf32>
    %196 = vector.extract_strided_slice %1 {offsets = [0, 0, 32], sizes = [1, 4, 1], strides = [1, 1, 1]} : vector<1x4x36xf32> to vector<1x4x1xf32>
    %197 = vector.extract_strided_slice %177 {offsets = [0, 3, 0], sizes = [2, 1, 256], strides = [1, 1, 1]} : vector<2x4x256xf32> to vector<2x1x256xf32>
    %198 = vector.broadcast %196 : vector<1x4x1xf32> to vector<2x4x256xf32>
    %199 = vector.broadcast %197 : vector<2x1x256xf32> to vector<2x4x256xf32>
    %200 = arith.mulf %198, %199 : vector<2x4x256xf32>
    %201 = arith.addf %195, %200 : vector<2x4x256xf32>
    %c241_i32 = arith.constant 241 : i32
    %202 = tpu.dynamic_rotate %0 by %c241_i32 dim 2 : vector<2x4x256xf32>, i32 -> vector<2x4x256xf32>
    %cst_20 = arith.constant 0.000000e+00 : f32
    %203 = vector.shape_cast %30 : vector<1x1x256xi1> to vector<1x1x256xi1>
    %204 = vector.broadcast %203 : vector<1x1x256xi1> to vector<2x4x256xi1>
    %205 = vector.broadcast %cst_20 : f32 to vector<2x4x256xf32>
    %206 = arith.select %204, %202, %205 : vector<2x4x256xi1>, vector<2x4x256xf32>
    %207 = vector.extract_strided_slice %1 {offsets = [0, 0, 6], sizes = [1, 4, 1], strides = [1, 1, 1]} : vector<1x4x36xf32> to vector<1x4x1xf32>
    %208 = vector.extract_strided_slice %206 {offsets = [0, 0, 0], sizes = [2, 1, 256], strides = [1, 1, 1]} : vector<2x4x256xf32> to vector<2x1x256xf32>
    %209 = vector.broadcast %207 : vector<1x4x1xf32> to vector<2x4x256xf32>
    %210 = vector.broadcast %208 : vector<2x1x256xf32> to vector<2x4x256xf32>
    %211 = arith.mulf %209, %210 : vector<2x4x256xf32>
    %212 = arith.addf %201, %211 : vector<2x4x256xf32>
    %213 = vector.extract_strided_slice %1 {offsets = [0, 0, 15], sizes = [1, 4, 1], strides = [1, 1, 1]} : vector<1x4x36xf32> to vector<1x4x1xf32>
    %214 = vector.extract_strided_slice %206 {offsets = [0, 1, 0], sizes = [2, 1, 256], strides = [1, 1, 1]} : vector<2x4x256xf32> to vector<2x1x256xf32>
    %215 = vector.broadcast %213 : vector<1x4x1xf32> to vector<2x4x256xf32>
    %216 = vector.broadcast %214 : vector<2x1x256xf32> to vector<2x4x256xf32>
    %217 = arith.mulf %215, %216 : vector<2x4x256xf32>
    %218 = arith.addf %212, %217 : vector<2x4x256xf32>
    %219 = vector.extract_strided_slice %1 {offsets = [0, 0, 24], sizes = [1, 4, 1], strides = [1, 1, 1]} : vector<1x4x36xf32> to vector<1x4x1xf32>
    %220 = vector.extract_strided_slice %206 {offsets = [0, 2, 0], sizes = [2, 1, 256], strides = [1, 1, 1]} : vector<2x4x256xf32> to vector<2x1x256xf32>
    %221 = vector.broadcast %219 : vector<1x4x1xf32> to vector<2x4x256xf32>
    %222 = vector.broadcast %220 : vector<2x1x256xf32> to vector<2x4x256xf32>
    %223 = arith.mulf %221, %222 : vector<2x4x256xf32>
    %224 = arith.addf %218, %223 : vector<2x4x256xf32>
    %225 = vector.extract_strided_slice %1 {offsets = [0, 0, 33], sizes = [1, 4, 1], strides = [1, 1, 1]} : vector<1x4x36xf32> to vector<1x4x1xf32>
    %226 = vector.extract_strided_slice %206 {offsets = [0, 3, 0], sizes = [2, 1, 256], strides = [1, 1, 1]} : vector<2x4x256xf32> to vector<2x1x256xf32>
    %227 = vector.broadcast %225 : vector<1x4x1xf32> to vector<2x4x256xf32>
    %228 = vector.broadcast %226 : vector<2x1x256xf32> to vector<2x4x256xf32>
    %229 = arith.mulf %227, %228 : vector<2x4x256xf32>
    %230 = arith.addf %224, %229 : vector<2x4x256xf32>
    %c240_i32_21 = arith.constant 240 : i32
    %231 = tpu.dynamic_rotate %0 by %c240_i32_21 dim 2 : vector<2x4x256xf32>, i32 -> vector<2x4x256xf32>
    %cst_22 = arith.constant 0.000000e+00 : f32
    %232 = vector.shape_cast %23 : vector<1x1x256xi1> to vector<1x1x256xi1>
    %233 = vector.broadcast %232 : vector<1x1x256xi1> to vector<2x4x256xi1>
    %234 = vector.broadcast %cst_22 : f32 to vector<2x4x256xf32>
    %235 = arith.select %233, %231, %234 : vector<2x4x256xi1>, vector<2x4x256xf32>
    %236 = vector.extract_strided_slice %1 {offsets = [0, 0, 7], sizes = [1, 4, 1], strides = [1, 1, 1]} : vector<1x4x36xf32> to vector<1x4x1xf32>
    %237 = vector.extract_strided_slice %235 {offsets = [0, 0, 0], sizes = [2, 1, 256], strides = [1, 1, 1]} : vector<2x4x256xf32> to vector<2x1x256xf32>
    %238 = vector.broadcast %236 : vector<1x4x1xf32> to vector<2x4x256xf32>
    %239 = vector.broadcast %237 : vector<2x1x256xf32> to vector<2x4x256xf32>
    %240 = arith.mulf %238, %239 : vector<2x4x256xf32>
    %241 = arith.addf %230, %240 : vector<2x4x256xf32>
    %242 = vector.extract_strided_slice %1 {offsets = [0, 0, 16], sizes = [1, 4, 1], strides = [1, 1, 1]} : vector<1x4x36xf32> to vector<1x4x1xf32>
    %243 = vector.extract_strided_slice %235 {offsets = [0, 1, 0], sizes = [2, 1, 256], strides = [1, 1, 1]} : vector<2x4x256xf32> to vector<2x1x256xf32>
    %244 = vector.broadcast %242 : vector<1x4x1xf32> to vector<2x4x256xf32>
    %245 = vector.broadcast %243 : vector<2x1x256xf32> to vector<2x4x256xf32>
    %246 = arith.mulf %244, %245 : vector<2x4x256xf32>
    %247 = arith.addf %241, %246 : vector<2x4x256xf32>
    %248 = vector.extract_strided_slice %1 {offsets = [0, 0, 25], sizes = [1, 4, 1], strides = [1, 1, 1]} : vector<1x4x36xf32> to vector<1x4x1xf32>
    %249 = vector.extract_strided_slice %235 {offsets = [0, 2, 0], sizes = [2, 1, 256], strides = [1, 1, 1]} : vector<2x4x256xf32> to vector<2x1x256xf32>
    %250 = vector.broadcast %248 : vector<1x4x1xf32> to vector<2x4x256xf32>
    %251 = vector.broadcast %249 : vector<2x1x256xf32> to vector<2x4x256xf32>
    %252 = arith.mulf %250, %251 : vector<2x4x256xf32>
    %253 = arith.addf %247, %252 : vector<2x4x256xf32>
    %254 = vector.extract_strided_slice %1 {offsets = [0, 0, 34], sizes = [1, 4, 1], strides = [1, 1, 1]} : vector<1x4x36xf32> to vector<1x4x1xf32>
    %255 = vector.extract_strided_slice %235 {offsets = [0, 3, 0], sizes = [2, 1, 256], strides = [1, 1, 1]} : vector<2x4x256xf32> to vector<2x1x256xf32>
    %256 = vector.broadcast %254 : vector<1x4x1xf32> to vector<2x4x256xf32>
    %257 = vector.broadcast %255 : vector<2x1x256xf32> to vector<2x4x256xf32>
    %258 = arith.mulf %256, %257 : vector<2x4x256xf32>
    %259 = arith.addf %253, %258 : vector<2x4x256xf32>
    %c239_i32 = arith.constant 239 : i32
    %260 = tpu.dynamic_rotate %0 by %c239_i32 dim 2 : vector<2x4x256xf32>, i32 -> vector<2x4x256xf32>
    %cst_23 = arith.constant 0.000000e+00 : f32
    %261 = vector.shape_cast %31 : vector<1x1x256xi1> to vector<1x1x256xi1>
    %262 = vector.broadcast %261 : vector<1x1x256xi1> to vector<2x4x256xi1>
    %263 = vector.broadcast %cst_23 : f32 to vector<2x4x256xf32>
    %264 = arith.select %262, %260, %263 : vector<2x4x256xi1>, vector<2x4x256xf32>
    %265 = vector.extract_strided_slice %1 {offsets = [0, 0, 8], sizes = [1, 4, 1], strides = [1, 1, 1]} : vector<1x4x36xf32> to vector<1x4x1xf32>
    %266 = vector.extract_strided_slice %264 {offsets = [0, 0, 0], sizes = [2, 1, 256], strides = [1, 1, 1]} : vector<2x4x256xf32> to vector<2x1x256xf32>
    %267 = vector.broadcast %265 : vector<1x4x1xf32> to vector<2x4x256xf32>
    %268 = vector.broadcast %266 : vector<2x1x256xf32> to vector<2x4x256xf32>
    %269 = arith.mulf %267, %268 : vector<2x4x256xf32>
    %270 = arith.addf %259, %269 : vector<2x4x256xf32>
    %271 = vector.extract_strided_slice %1 {offsets = [0, 0, 17], sizes = [1, 4, 1], strides = [1, 1, 1]} : vector<1x4x36xf32> to vector<1x4x1xf32>
    %272 = vector.extract_strided_slice %264 {offsets = [0, 1, 0], sizes = [2, 1, 256], strides = [1, 1, 1]} : vector<2x4x256xf32> to vector<2x1x256xf32>
    %273 = vector.broadcast %271 : vector<1x4x1xf32> to vector<2x4x256xf32>
    %274 = vector.broadcast %272 : vector<2x1x256xf32> to vector<2x4x256xf32>
    %275 = arith.mulf %273, %274 : vector<2x4x256xf32>
    %276 = arith.addf %270, %275 : vector<2x4x256xf32>
    %277 = vector.extract_strided_slice %1 {offsets = [0, 0, 26], sizes = [1, 4, 1], strides = [1, 1, 1]} : vector<1x4x36xf32> to vector<1x4x1xf32>
    %278 = vector.extract_strided_slice %264 {offsets = [0, 2, 0], sizes = [2, 1, 256], strides = [1, 1, 1]} : vector<2x4x256xf32> to vector<2x1x256xf32>
    %279 = vector.broadcast %277 : vector<1x4x1xf32> to vector<2x4x256xf32>
    %280 = vector.broadcast %278 : vector<2x1x256xf32> to vector<2x4x256xf32>
    %281 = arith.mulf %279, %280 : vector<2x4x256xf32>
    %282 = arith.addf %276, %281 : vector<2x4x256xf32>
    %283 = vector.extract_strided_slice %1 {offsets = [0, 0, 35], sizes = [1, 4, 1], strides = [1, 1, 1]} : vector<1x4x36xf32> to vector<1x4x1xf32>
    %284 = vector.extract_strided_slice %264 {offsets = [0, 3, 0], sizes = [2, 1, 256], strides = [1, 1, 1]} : vector<2x4x256xf32> to vector<2x1x256xf32>
    %285 = vector.broadcast %283 : vector<1x4x1xf32> to vector<2x4x256xf32>
    %286 = vector.broadcast %284 : vector<2x1x256xf32> to vector<2x4x256xf32>
    %287 = arith.mulf %285, %286 : vector<2x4x256xf32>
    %288 = arith.addf %282, %287 : vector<2x4x256xf32>
    %cst_24 = arith.constant 0.000000e+00 : f32
    %289 = vector.broadcast %cst_24 : f32 to vector<2x4x256xf32>
    %290 = arith.maximumf %288, %289 : vector<2x4x256xf32>
    %cst_25 = arith.constant 0.000000e+00 : f32
    %291 = vector.broadcast %cst_25 : f32 to vector<2x4x256xf32>
    %c17_i32_26 = arith.constant 17 : i32
    %292 = tpu.dynamic_rotate %290 by %c17_i32_26 dim 2 : vector<2x4x256xf32>, i32 -> vector<2x4x256xf32>
    %cst_27 = arith.constant 0.000000e+00 : f32
    %293 = vector.shape_cast %28 : vector<1x1x256xi1> to vector<1x1x256xi1>
    %294 = vector.broadcast %293 : vector<1x1x256xi1> to vector<2x4x256xi1>
    %295 = vector.broadcast %cst_27 : f32 to vector<2x4x256xf32>
    %296 = arith.select %294, %292, %295 : vector<2x4x256xi1>, vector<2x4x256xf32>
    %297 = vector.extract_strided_slice %2 {offsets = [0, 0, 0], sizes = [1, 4, 1], strides = [1, 1, 1]} : vector<1x4x36xf32> to vector<1x4x1xf32>
    %298 = vector.extract_strided_slice %296 {offsets = [0, 0, 0], sizes = [2, 1, 256], strides = [1, 1, 1]} : vector<2x4x256xf32> to vector<2x1x256xf32>
    %299 = vector.broadcast %297 : vector<1x4x1xf32> to vector<2x4x256xf32>
    %300 = vector.broadcast %298 : vector<2x1x256xf32> to vector<2x4x256xf32>
    %301 = arith.mulf %299, %300 : vector<2x4x256xf32>
    %302 = arith.addf %291, %301 : vector<2x4x256xf32>
    %303 = vector.extract_strided_slice %2 {offsets = [0, 0, 9], sizes = [1, 4, 1], strides = [1, 1, 1]} : vector<1x4x36xf32> to vector<1x4x1xf32>
    %304 = vector.extract_strided_slice %296 {offsets = [0, 1, 0], sizes = [2, 1, 256], strides = [1, 1, 1]} : vector<2x4x256xf32> to vector<2x1x256xf32>
    %305 = vector.broadcast %303 : vector<1x4x1xf32> to vector<2x4x256xf32>
    %306 = vector.broadcast %304 : vector<2x1x256xf32> to vector<2x4x256xf32>
    %307 = arith.mulf %305, %306 : vector<2x4x256xf32>
    %308 = arith.addf %302, %307 : vector<2x4x256xf32>
    %309 = vector.extract_strided_slice %2 {offsets = [0, 0, 18], sizes = [1, 4, 1], strides = [1, 1, 1]} : vector<1x4x36xf32> to vector<1x4x1xf32>
    %310 = vector.extract_strided_slice %296 {offsets = [0, 2, 0], sizes = [2, 1, 256], strides = [1, 1, 1]} : vector<2x4x256xf32> to vector<2x1x256xf32>
    %311 = vector.broadcast %309 : vector<1x4x1xf32> to vector<2x4x256xf32>
    %312 = vector.broadcast %310 : vector<2x1x256xf32> to vector<2x4x256xf32>
    %313 = arith.mulf %311, %312 : vector<2x4x256xf32>
    %314 = arith.addf %308, %313 : vector<2x4x256xf32>
    %315 = vector.extract_strided_slice %2 {offsets = [0, 0, 27], sizes = [1, 4, 1], strides = [1, 1, 1]} : vector<1x4x36xf32> to vector<1x4x1xf32>
    %316 = vector.extract_strided_slice %296 {offsets = [0, 3, 0], sizes = [2, 1, 256], strides = [1, 1, 1]} : vector<2x4x256xf32> to vector<2x1x256xf32>
    %317 = vector.broadcast %315 : vector<1x4x1xf32> to vector<2x4x256xf32>
    %318 = vector.broadcast %316 : vector<2x1x256xf32> to vector<2x4x256xf32>
    %319 = arith.mulf %317, %318 : vector<2x4x256xf32>
    %320 = arith.addf %314, %319 : vector<2x4x256xf32>
    %c16_i32_28 = arith.constant 16 : i32
    %321 = tpu.dynamic_rotate %290 by %c16_i32_28 dim 2 : vector<2x4x256xf32>, i32 -> vector<2x4x256xf32>
    %cst_29 = arith.constant 0.000000e+00 : f32
    %322 = vector.shape_cast %21 : vector<1x1x256xi1> to vector<1x1x256xi1>
    %323 = vector.broadcast %322 : vector<1x1x256xi1> to vector<2x4x256xi1>
    %324 = vector.broadcast %cst_29 : f32 to vector<2x4x256xf32>
    %325 = arith.select %323, %321, %324 : vector<2x4x256xi1>, vector<2x4x256xf32>
    %326 = vector.extract_strided_slice %2 {offsets = [0, 0, 1], sizes = [1, 4, 1], strides = [1, 1, 1]} : vector<1x4x36xf32> to vector<1x4x1xf32>
    %327 = vector.extract_strided_slice %325 {offsets = [0, 0, 0], sizes = [2, 1, 256], strides = [1, 1, 1]} : vector<2x4x256xf32> to vector<2x1x256xf32>
    %328 = vector.broadcast %326 : vector<1x4x1xf32> to vector<2x4x256xf32>
    %329 = vector.broadcast %327 : vector<2x1x256xf32> to vector<2x4x256xf32>
    %330 = arith.mulf %328, %329 : vector<2x4x256xf32>
    %331 = arith.addf %320, %330 : vector<2x4x256xf32>
    %332 = vector.extract_strided_slice %2 {offsets = [0, 0, 10], sizes = [1, 4, 1], strides = [1, 1, 1]} : vector<1x4x36xf32> to vector<1x4x1xf32>
    %333 = vector.extract_strided_slice %325 {offsets = [0, 1, 0], sizes = [2, 1, 256], strides = [1, 1, 1]} : vector<2x4x256xf32> to vector<2x1x256xf32>
    %334 = vector.broadcast %332 : vector<1x4x1xf32> to vector<2x4x256xf32>
    %335 = vector.broadcast %333 : vector<2x1x256xf32> to vector<2x4x256xf32>
    %336 = arith.mulf %334, %335 : vector<2x4x256xf32>
    %337 = arith.addf %331, %336 : vector<2x4x256xf32>
    %338 = vector.extract_strided_slice %2 {offsets = [0, 0, 19], sizes = [1, 4, 1], strides = [1, 1, 1]} : vector<1x4x36xf32> to vector<1x4x1xf32>
    %339 = vector.extract_strided_slice %325 {offsets = [0, 2, 0], sizes = [2, 1, 256], strides = [1, 1, 1]} : vector<2x4x256xf32> to vector<2x1x256xf32>
    %340 = vector.broadcast %338 : vector<1x4x1xf32> to vector<2x4x256xf32>
    %341 = vector.broadcast %339 : vector<2x1x256xf32> to vector<2x4x256xf32>
    %342 = arith.mulf %340, %341 : vector<2x4x256xf32>
    %343 = arith.addf %337, %342 : vector<2x4x256xf32>
    %344 = vector.extract_strided_slice %2 {offsets = [0, 0, 28], sizes = [1, 4, 1], strides = [1, 1, 1]} : vector<1x4x36xf32> to vector<1x4x1xf32>
    %345 = vector.extract_strided_slice %325 {offsets = [0, 3, 0], sizes = [2, 1, 256], strides = [1, 1, 1]} : vector<2x4x256xf32> to vector<2x1x256xf32>
    %346 = vector.broadcast %344 : vector<1x4x1xf32> to vector<2x4x256xf32>
    %347 = vector.broadcast %345 : vector<2x1x256xf32> to vector<2x4x256xf32>
    %348 = arith.mulf %346, %347 : vector<2x4x256xf32>
    %349 = arith.addf %343, %348 : vector<2x4x256xf32>
    %c15_i32_30 = arith.constant 15 : i32
    %350 = tpu.dynamic_rotate %290 by %c15_i32_30 dim 2 : vector<2x4x256xf32>, i32 -> vector<2x4x256xf32>
    %cst_31 = arith.constant 0.000000e+00 : f32
    %351 = vector.shape_cast %29 : vector<1x1x256xi1> to vector<1x1x256xi1>
    %352 = vector.broadcast %351 : vector<1x1x256xi1> to vector<2x4x256xi1>
    %353 = vector.broadcast %cst_31 : f32 to vector<2x4x256xf32>
    %354 = arith.select %352, %350, %353 : vector<2x4x256xi1>, vector<2x4x256xf32>
    %355 = vector.extract_strided_slice %2 {offsets = [0, 0, 2], sizes = [1, 4, 1], strides = [1, 1, 1]} : vector<1x4x36xf32> to vector<1x4x1xf32>
    %356 = vector.extract_strided_slice %354 {offsets = [0, 0, 0], sizes = [2, 1, 256], strides = [1, 1, 1]} : vector<2x4x256xf32> to vector<2x1x256xf32>
    %357 = vector.broadcast %355 : vector<1x4x1xf32> to vector<2x4x256xf32>
    %358 = vector.broadcast %356 : vector<2x1x256xf32> to vector<2x4x256xf32>
    %359 = arith.mulf %357, %358 : vector<2x4x256xf32>
    %360 = arith.addf %349, %359 : vector<2x4x256xf32>
    %361 = vector.extract_strided_slice %2 {offsets = [0, 0, 11], sizes = [1, 4, 1], strides = [1, 1, 1]} : vector<1x4x36xf32> to vector<1x4x1xf32>
    %362 = vector.extract_strided_slice %354 {offsets = [0, 1, 0], sizes = [2, 1, 256], strides = [1, 1, 1]} : vector<2x4x256xf32> to vector<2x1x256xf32>
    %363 = vector.broadcast %361 : vector<1x4x1xf32> to vector<2x4x256xf32>
    %364 = vector.broadcast %362 : vector<2x1x256xf32> to vector<2x4x256xf32>
    %365 = arith.mulf %363, %364 : vector<2x4x256xf32>
    %366 = arith.addf %360, %365 : vector<2x4x256xf32>
    %367 = vector.extract_strided_slice %2 {offsets = [0, 0, 20], sizes = [1, 4, 1], strides = [1, 1, 1]} : vector<1x4x36xf32> to vector<1x4x1xf32>
    %368 = vector.extract_strided_slice %354 {offsets = [0, 2, 0], sizes = [2, 1, 256], strides = [1, 1, 1]} : vector<2x4x256xf32> to vector<2x1x256xf32>
    %369 = vector.broadcast %367 : vector<1x4x1xf32> to vector<2x4x256xf32>
    %370 = vector.broadcast %368 : vector<2x1x256xf32> to vector<2x4x256xf32>
    %371 = arith.mulf %369, %370 : vector<2x4x256xf32>
    %372 = arith.addf %366, %371 : vector<2x4x256xf32>
    %373 = vector.extract_strided_slice %2 {offsets = [0, 0, 29], sizes = [1, 4, 1], strides = [1, 1, 1]} : vector<1x4x36xf32> to vector<1x4x1xf32>
    %374 = vector.extract_strided_slice %354 {offsets = [0, 3, 0], sizes = [2, 1, 256], strides = [1, 1, 1]} : vector<2x4x256xf32> to vector<2x1x256xf32>
    %375 = vector.broadcast %373 : vector<1x4x1xf32> to vector<2x4x256xf32>
    %376 = vector.broadcast %374 : vector<2x1x256xf32> to vector<2x4x256xf32>
    %377 = arith.mulf %375, %376 : vector<2x4x256xf32>
    %378 = arith.addf %372, %377 : vector<2x4x256xf32>
    %c1_i32_32 = arith.constant 1 : i32
    %379 = tpu.dynamic_rotate %290 by %c1_i32_32 dim 2 : vector<2x4x256xf32>, i32 -> vector<2x4x256xf32>
    %cst_33 = arith.constant 0.000000e+00 : f32
    %380 = vector.shape_cast %25 : vector<1x1x256xi1> to vector<1x1x256xi1>
    %381 = vector.broadcast %380 : vector<1x1x256xi1> to vector<2x4x256xi1>
    %382 = vector.broadcast %cst_33 : f32 to vector<2x4x256xf32>
    %383 = arith.select %381, %379, %382 : vector<2x4x256xi1>, vector<2x4x256xf32>
    %384 = vector.extract_strided_slice %2 {offsets = [0, 0, 3], sizes = [1, 4, 1], strides = [1, 1, 1]} : vector<1x4x36xf32> to vector<1x4x1xf32>
    %385 = vector.extract_strided_slice %383 {offsets = [0, 0, 0], sizes = [2, 1, 256], strides = [1, 1, 1]} : vector<2x4x256xf32> to vector<2x1x256xf32>
    %386 = vector.broadcast %384 : vector<1x4x1xf32> to vector<2x4x256xf32>
    %387 = vector.broadcast %385 : vector<2x1x256xf32> to vector<2x4x256xf32>
    %388 = arith.mulf %386, %387 : vector<2x4x256xf32>
    %389 = arith.addf %378, %388 : vector<2x4x256xf32>
    %390 = vector.extract_strided_slice %2 {offsets = [0, 0, 12], sizes = [1, 4, 1], strides = [1, 1, 1]} : vector<1x4x36xf32> to vector<1x4x1xf32>
    %391 = vector.extract_strided_slice %383 {offsets = [0, 1, 0], sizes = [2, 1, 256], strides = [1, 1, 1]} : vector<2x4x256xf32> to vector<2x1x256xf32>
    %392 = vector.broadcast %390 : vector<1x4x1xf32> to vector<2x4x256xf32>
    %393 = vector.broadcast %391 : vector<2x1x256xf32> to vector<2x4x256xf32>
    %394 = arith.mulf %392, %393 : vector<2x4x256xf32>
    %395 = arith.addf %389, %394 : vector<2x4x256xf32>
    %396 = vector.extract_strided_slice %2 {offsets = [0, 0, 21], sizes = [1, 4, 1], strides = [1, 1, 1]} : vector<1x4x36xf32> to vector<1x4x1xf32>
    %397 = vector.extract_strided_slice %383 {offsets = [0, 2, 0], sizes = [2, 1, 256], strides = [1, 1, 1]} : vector<2x4x256xf32> to vector<2x1x256xf32>
    %398 = vector.broadcast %396 : vector<1x4x1xf32> to vector<2x4x256xf32>
    %399 = vector.broadcast %397 : vector<2x1x256xf32> to vector<2x4x256xf32>
    %400 = arith.mulf %398, %399 : vector<2x4x256xf32>
    %401 = arith.addf %395, %400 : vector<2x4x256xf32>
    %402 = vector.extract_strided_slice %2 {offsets = [0, 0, 30], sizes = [1, 4, 1], strides = [1, 1, 1]} : vector<1x4x36xf32> to vector<1x4x1xf32>
    %403 = vector.extract_strided_slice %383 {offsets = [0, 3, 0], sizes = [2, 1, 256], strides = [1, 1, 1]} : vector<2x4x256xf32> to vector<2x1x256xf32>
    %404 = vector.broadcast %402 : vector<1x4x1xf32> to vector<2x4x256xf32>
    %405 = vector.broadcast %403 : vector<2x1x256xf32> to vector<2x4x256xf32>
    %406 = arith.mulf %404, %405 : vector<2x4x256xf32>
    %407 = arith.addf %401, %406 : vector<2x4x256xf32>
    %408 = vector.extract_strided_slice %2 {offsets = [0, 0, 4], sizes = [1, 4, 1], strides = [1, 1, 1]} : vector<1x4x36xf32> to vector<1x4x1xf32>
    %409 = vector.extract_strided_slice %290 {offsets = [0, 0, 0], sizes = [2, 1, 256], strides = [1, 1, 1]} : vector<2x4x256xf32> to vector<2x1x256xf32>
    %410 = vector.broadcast %408 : vector<1x4x1xf32> to vector<2x4x256xf32>
    %411 = vector.broadcast %409 : vector<2x1x256xf32> to vector<2x4x256xf32>
    %412 = arith.mulf %410, %411 : vector<2x4x256xf32>
    %413 = arith.addf %407, %412 : vector<2x4x256xf32>
    %414 = vector.extract_strided_slice %2 {offsets = [0, 0, 13], sizes = [1, 4, 1], strides = [1, 1, 1]} : vector<1x4x36xf32> to vector<1x4x1xf32>
    %415 = vector.extract_strided_slice %290 {offsets = [0, 1, 0], sizes = [2, 1, 256], strides = [1, 1, 1]} : vector<2x4x256xf32> to vector<2x1x256xf32>
    %416 = vector.broadcast %414 : vector<1x4x1xf32> to vector<2x4x256xf32>
    %417 = vector.broadcast %415 : vector<2x1x256xf32> to vector<2x4x256xf32>
    %418 = arith.mulf %416, %417 : vector<2x4x256xf32>
    %419 = arith.addf %413, %418 : vector<2x4x256xf32>
    %420 = vector.extract_strided_slice %2 {offsets = [0, 0, 22], sizes = [1, 4, 1], strides = [1, 1, 1]} : vector<1x4x36xf32> to vector<1x4x1xf32>
    %421 = vector.extract_strided_slice %290 {offsets = [0, 2, 0], sizes = [2, 1, 256], strides = [1, 1, 1]} : vector<2x4x256xf32> to vector<2x1x256xf32>
    %422 = vector.broadcast %420 : vector<1x4x1xf32> to vector<2x4x256xf32>
    %423 = vector.broadcast %421 : vector<2x1x256xf32> to vector<2x4x256xf32>
    %424 = arith.mulf %422, %423 : vector<2x4x256xf32>
    %425 = arith.addf %419, %424 : vector<2x4x256xf32>
    %426 = vector.extract_strided_slice %2 {offsets = [0, 0, 31], sizes = [1, 4, 1], strides = [1, 1, 1]} : vector<1x4x36xf32> to vector<1x4x1xf32>
    %427 = vector.extract_strided_slice %290 {offsets = [0, 3, 0], sizes = [2, 1, 256], strides = [1, 1, 1]} : vector<2x4x256xf32> to vector<2x1x256xf32>
    %428 = vector.broadcast %426 : vector<1x4x1xf32> to vector<2x4x256xf32>
    %429 = vector.broadcast %427 : vector<2x1x256xf32> to vector<2x4x256xf32>
    %430 = arith.mulf %428, %429 : vector<2x4x256xf32>
    %431 = arith.addf %425, %430 : vector<2x4x256xf32>
    %c255_i32_34 = arith.constant 255 : i32
    %432 = tpu.dynamic_rotate %290 by %c255_i32_34 dim 2 : vector<2x4x256xf32>, i32 -> vector<2x4x256xf32>
    %cst_35 = arith.constant 0.000000e+00 : f32
    %433 = vector.shape_cast %27 : vector<1x1x256xi1> to vector<1x1x256xi1>
    %434 = vector.broadcast %433 : vector<1x1x256xi1> to vector<2x4x256xi1>
    %435 = vector.broadcast %cst_35 : f32 to vector<2x4x256xf32>
    %436 = arith.select %434, %432, %435 : vector<2x4x256xi1>, vector<2x4x256xf32>
    %437 = vector.extract_strided_slice %2 {offsets = [0, 0, 5], sizes = [1, 4, 1], strides = [1, 1, 1]} : vector<1x4x36xf32> to vector<1x4x1xf32>
    %438 = vector.extract_strided_slice %436 {offsets = [0, 0, 0], sizes = [2, 1, 256], strides = [1, 1, 1]} : vector<2x4x256xf32> to vector<2x1x256xf32>
    %439 = vector.broadcast %437 : vector<1x4x1xf32> to vector<2x4x256xf32>
    %440 = vector.broadcast %438 : vector<2x1x256xf32> to vector<2x4x256xf32>
    %441 = arith.mulf %439, %440 : vector<2x4x256xf32>
    %442 = arith.addf %431, %441 : vector<2x4x256xf32>
    %443 = vector.extract_strided_slice %2 {offsets = [0, 0, 14], sizes = [1, 4, 1], strides = [1, 1, 1]} : vector<1x4x36xf32> to vector<1x4x1xf32>
    %444 = vector.extract_strided_slice %436 {offsets = [0, 1, 0], sizes = [2, 1, 256], strides = [1, 1, 1]} : vector<2x4x256xf32> to vector<2x1x256xf32>
    %445 = vector.broadcast %443 : vector<1x4x1xf32> to vector<2x4x256xf32>
    %446 = vector.broadcast %444 : vector<2x1x256xf32> to vector<2x4x256xf32>
    %447 = arith.mulf %445, %446 : vector<2x4x256xf32>
    %448 = arith.addf %442, %447 : vector<2x4x256xf32>
    %449 = vector.extract_strided_slice %2 {offsets = [0, 0, 23], sizes = [1, 4, 1], strides = [1, 1, 1]} : vector<1x4x36xf32> to vector<1x4x1xf32>
    %450 = vector.extract_strided_slice %436 {offsets = [0, 2, 0], sizes = [2, 1, 256], strides = [1, 1, 1]} : vector<2x4x256xf32> to vector<2x1x256xf32>
    %451 = vector.broadcast %449 : vector<1x4x1xf32> to vector<2x4x256xf32>
    %452 = vector.broadcast %450 : vector<2x1x256xf32> to vector<2x4x256xf32>
    %453 = arith.mulf %451, %452 : vector<2x4x256xf32>
    %454 = arith.addf %448, %453 : vector<2x4x256xf32>
    %455 = vector.extract_strided_slice %2 {offsets = [0, 0, 32], sizes = [1, 4, 1], strides = [1, 1, 1]} : vector<1x4x36xf32> to vector<1x4x1xf32>
    %456 = vector.extract_strided_slice %436 {offsets = [0, 3, 0], sizes = [2, 1, 256], strides = [1, 1, 1]} : vector<2x4x256xf32> to vector<2x1x256xf32>
    %457 = vector.broadcast %455 : vector<1x4x1xf32> to vector<2x4x256xf32>
    %458 = vector.broadcast %456 : vector<2x1x256xf32> to vector<2x4x256xf32>
    %459 = arith.mulf %457, %458 : vector<2x4x256xf32>
    %460 = arith.addf %454, %459 : vector<2x4x256xf32>
    %c241_i32_36 = arith.constant 241 : i32
    %461 = tpu.dynamic_rotate %290 by %c241_i32_36 dim 2 : vector<2x4x256xf32>, i32 -> vector<2x4x256xf32>
    %cst_37 = arith.constant 0.000000e+00 : f32
    %462 = vector.shape_cast %30 : vector<1x1x256xi1> to vector<1x1x256xi1>
    %463 = vector.broadcast %462 : vector<1x1x256xi1> to vector<2x4x256xi1>
    %464 = vector.broadcast %cst_37 : f32 to vector<2x4x256xf32>
    %465 = arith.select %463, %461, %464 : vector<2x4x256xi1>, vector<2x4x256xf32>
    %466 = vector.extract_strided_slice %2 {offsets = [0, 0, 6], sizes = [1, 4, 1], strides = [1, 1, 1]} : vector<1x4x36xf32> to vector<1x4x1xf32>
    %467 = vector.extract_strided_slice %465 {offsets = [0, 0, 0], sizes = [2, 1, 256], strides = [1, 1, 1]} : vector<2x4x256xf32> to vector<2x1x256xf32>
    %468 = vector.broadcast %466 : vector<1x4x1xf32> to vector<2x4x256xf32>
    %469 = vector.broadcast %467 : vector<2x1x256xf32> to vector<2x4x256xf32>
    %470 = arith.mulf %468, %469 : vector<2x4x256xf32>
    %471 = arith.addf %460, %470 : vector<2x4x256xf32>
    %472 = vector.extract_strided_slice %2 {offsets = [0, 0, 15], sizes = [1, 4, 1], strides = [1, 1, 1]} : vector<1x4x36xf32> to vector<1x4x1xf32>
    %473 = vector.extract_strided_slice %465 {offsets = [0, 1, 0], sizes = [2, 1, 256], strides = [1, 1, 1]} : vector<2x4x256xf32> to vector<2x1x256xf32>
    %474 = vector.broadcast %472 : vector<1x4x1xf32> to vector<2x4x256xf32>
    %475 = vector.broadcast %473 : vector<2x1x256xf32> to vector<2x4x256xf32>
    %476 = arith.mulf %474, %475 : vector<2x4x256xf32>
    %477 = arith.addf %471, %476 : vector<2x4x256xf32>
    %478 = vector.extract_strided_slice %2 {offsets = [0, 0, 24], sizes = [1, 4, 1], strides = [1, 1, 1]} : vector<1x4x36xf32> to vector<1x4x1xf32>
    %479 = vector.extract_strided_slice %465 {offsets = [0, 2, 0], sizes = [2, 1, 256], strides = [1, 1, 1]} : vector<2x4x256xf32> to vector<2x1x256xf32>
    %480 = vector.broadcast %478 : vector<1x4x1xf32> to vector<2x4x256xf32>
    %481 = vector.broadcast %479 : vector<2x1x256xf32> to vector<2x4x256xf32>
    %482 = arith.mulf %480, %481 : vector<2x4x256xf32>
    %483 = arith.addf %477, %482 : vector<2x4x256xf32>
    %484 = vector.extract_strided_slice %2 {offsets = [0, 0, 33], sizes = [1, 4, 1], strides = [1, 1, 1]} : vector<1x4x36xf32> to vector<1x4x1xf32>
    %485 = vector.extract_strided_slice %465 {offsets = [0, 3, 0], sizes = [2, 1, 256], strides = [1, 1, 1]} : vector<2x4x256xf32> to vector<2x1x256xf32>
    %486 = vector.broadcast %484 : vector<1x4x1xf32> to vector<2x4x256xf32>
    %487 = vector.broadcast %485 : vector<2x1x256xf32> to vector<2x4x256xf32>
    %488 = arith.mulf %486, %487 : vector<2x4x256xf32>
    %489 = arith.addf %483, %488 : vector<2x4x256xf32>
    %c240_i32_38 = arith.constant 240 : i32
    %490 = tpu.dynamic_rotate %290 by %c240_i32_38 dim 2 : vector<2x4x256xf32>, i32 -> vector<2x4x256xf32>
    %cst_39 = arith.constant 0.000000e+00 : f32
    %491 = vector.shape_cast %23 : vector<1x1x256xi1> to vector<1x1x256xi1>
    %492 = vector.broadcast %491 : vector<1x1x256xi1> to vector<2x4x256xi1>
    %493 = vector.broadcast %cst_39 : f32 to vector<2x4x256xf32>
    %494 = arith.select %492, %490, %493 : vector<2x4x256xi1>, vector<2x4x256xf32>
    %495 = vector.extract_strided_slice %2 {offsets = [0, 0, 7], sizes = [1, 4, 1], strides = [1, 1, 1]} : vector<1x4x36xf32> to vector<1x4x1xf32>
    %496 = vector.extract_strided_slice %494 {offsets = [0, 0, 0], sizes = [2, 1, 256], strides = [1, 1, 1]} : vector<2x4x256xf32> to vector<2x1x256xf32>
    %497 = vector.broadcast %495 : vector<1x4x1xf32> to vector<2x4x256xf32>
    %498 = vector.broadcast %496 : vector<2x1x256xf32> to vector<2x4x256xf32>
    %499 = arith.mulf %497, %498 : vector<2x4x256xf32>
    %500 = arith.addf %489, %499 : vector<2x4x256xf32>
    %501 = vector.extract_strided_slice %2 {offsets = [0, 0, 16], sizes = [1, 4, 1], strides = [1, 1, 1]} : vector<1x4x36xf32> to vector<1x4x1xf32>
    %502 = vector.extract_strided_slice %494 {offsets = [0, 1, 0], sizes = [2, 1, 256], strides = [1, 1, 1]} : vector<2x4x256xf32> to vector<2x1x256xf32>
    %503 = vector.broadcast %501 : vector<1x4x1xf32> to vector<2x4x256xf32>
    %504 = vector.broadcast %502 : vector<2x1x256xf32> to vector<2x4x256xf32>
    %505 = arith.mulf %503, %504 : vector<2x4x256xf32>
    %506 = arith.addf %500, %505 : vector<2x4x256xf32>
    %507 = vector.extract_strided_slice %2 {offsets = [0, 0, 25], sizes = [1, 4, 1], strides = [1, 1, 1]} : vector<1x4x36xf32> to vector<1x4x1xf32>
    %508 = vector.extract_strided_slice %494 {offsets = [0, 2, 0], sizes = [2, 1, 256], strides = [1, 1, 1]} : vector<2x4x256xf32> to vector<2x1x256xf32>
    %509 = vector.broadcast %507 : vector<1x4x1xf32> to vector<2x4x256xf32>
    %510 = vector.broadcast %508 : vector<2x1x256xf32> to vector<2x4x256xf32>
    %511 = arith.mulf %509, %510 : vector<2x4x256xf32>
    %512 = arith.addf %506, %511 : vector<2x4x256xf32>
    %513 = vector.extract_strided_slice %2 {offsets = [0, 0, 34], sizes = [1, 4, 1], strides = [1, 1, 1]} : vector<1x4x36xf32> to vector<1x4x1xf32>
    %514 = vector.extract_strided_slice %494 {offsets = [0, 3, 0], sizes = [2, 1, 256], strides = [1, 1, 1]} : vector<2x4x256xf32> to vector<2x1x256xf32>
    %515 = vector.broadcast %513 : vector<1x4x1xf32> to vector<2x4x256xf32>
    %516 = vector.broadcast %514 : vector<2x1x256xf32> to vector<2x4x256xf32>
    %517 = arith.mulf %515, %516 : vector<2x4x256xf32>
    %518 = arith.addf %512, %517 : vector<2x4x256xf32>
    %c239_i32_40 = arith.constant 239 : i32
    %519 = tpu.dynamic_rotate %290 by %c239_i32_40 dim 2 : vector<2x4x256xf32>, i32 -> vector<2x4x256xf32>
    %cst_41 = arith.constant 0.000000e+00 : f32
    %520 = vector.shape_cast %31 : vector<1x1x256xi1> to vector<1x1x256xi1>
    %521 = vector.broadcast %520 : vector<1x1x256xi1> to vector<2x4x256xi1>
    %522 = vector.broadcast %cst_41 : f32 to vector<2x4x256xf32>
    %523 = arith.select %521, %519, %522 : vector<2x4x256xi1>, vector<2x4x256xf32>
    %524 = vector.extract_strided_slice %2 {offsets = [0, 0, 8], sizes = [1, 4, 1], strides = [1, 1, 1]} : vector<1x4x36xf32> to vector<1x4x1xf32>
    %525 = vector.extract_strided_slice %523 {offsets = [0, 0, 0], sizes = [2, 1, 256], strides = [1, 1, 1]} : vector<2x4x256xf32> to vector<2x1x256xf32>
    %526 = vector.broadcast %524 : vector<1x4x1xf32> to vector<2x4x256xf32>
    %527 = vector.broadcast %525 : vector<2x1x256xf32> to vector<2x4x256xf32>
    %528 = arith.mulf %526, %527 : vector<2x4x256xf32>
    %529 = arith.addf %518, %528 : vector<2x4x256xf32>
    %530 = vector.extract_strided_slice %2 {offsets = [0, 0, 17], sizes = [1, 4, 1], strides = [1, 1, 1]} : vector<1x4x36xf32> to vector<1x4x1xf32>
    %531 = vector.extract_strided_slice %523 {offsets = [0, 1, 0], sizes = [2, 1, 256], strides = [1, 1, 1]} : vector<2x4x256xf32> to vector<2x1x256xf32>
    %532 = vector.broadcast %530 : vector<1x4x1xf32> to vector<2x4x256xf32>
    %533 = vector.broadcast %531 : vector<2x1x256xf32> to vector<2x4x256xf32>
    %534 = arith.mulf %532, %533 : vector<2x4x256xf32>
    %535 = arith.addf %529, %534 : vector<2x4x256xf32>
    %536 = vector.extract_strided_slice %2 {offsets = [0, 0, 26], sizes = [1, 4, 1], strides = [1, 1, 1]} : vector<1x4x36xf32> to vector<1x4x1xf32>
    %537 = vector.extract_strided_slice %523 {offsets = [0, 2, 0], sizes = [2, 1, 256], strides = [1, 1, 1]} : vector<2x4x256xf32> to vector<2x1x256xf32>
    %538 = vector.broadcast %536 : vector<1x4x1xf32> to vector<2x4x256xf32>
    %539 = vector.broadcast %537 : vector<2x1x256xf32> to vector<2x4x256xf32>
    %540 = arith.mulf %538, %539 : vector<2x4x256xf32>
    %541 = arith.addf %535, %540 : vector<2x4x256xf32>
    %542 = vector.extract_strided_slice %2 {offsets = [0, 0, 35], sizes = [1, 4, 1], strides = [1, 1, 1]} : vector<1x4x36xf32> to vector<1x4x1xf32>
    %543 = vector.extract_strided_slice %523 {offsets = [0, 3, 0], sizes = [2, 1, 256], strides = [1, 1, 1]} : vector<2x4x256xf32> to vector<2x1x256xf32>
    %544 = vector.broadcast %542 : vector<1x4x1xf32> to vector<2x4x256xf32>
    %545 = vector.broadcast %543 : vector<2x1x256xf32> to vector<2x4x256xf32>
    %546 = arith.mulf %544, %545 : vector<2x4x256xf32>
    %547 = arith.addf %541, %546 : vector<2x4x256xf32>
    %548 = arith.addf %547, %0 : vector<2x4x256xf32>
    %cst_42 = arith.constant 0.000000e+00 : f32
    %549 = vector.broadcast %cst_42 : f32 to vector<2x4x256xf32>
    %550 = arith.maximumf %548, %549 : vector<2x4x256xf32>
    %c0_43 = arith.constant 0 : index
    %c0_44 = arith.constant 0 : index
    %c0_45 = arith.constant 0 : index
    %551 = vector.load %arg4[%c0_43, %c0_44, %c0_45] : memref<2x4x256xf32, #tpu.memory_space<vmem>>, vector<2x4x256xf32>
    tpu.vector_store %arg4[%c0_43, %c0_44, %c0_45], %550 {strides = array<i32>} : memref<2x4x256xf32, #tpu.memory_space<vmem>>, vector<2x4x256xf32>,
    return
  }
  func.func @transform_0(%arg0: i32) -> (i32, i32, i32) {
    %c0_i32 = arith.constant 0 : i32
    %c0_i32_0 = arith.constant 0 : i32
    %c0_i32_1 = arith.constant 0 : i32
    %c0_i32_2 = arith.constant 0 : i32
    return %c0_i32, %c0_i32_0, %c0_i32_1 : i32, i32, i32
  }
  func.func @transform_1(%arg0: i32) -> (i32, i32, i32) {
    %c0_i32 = arith.constant 0 : i32
    %c0_i32_0 = arith.constant 0 : i32
    %c0_i32_1 = arith.constant 0 : i32
    %c0_i32_2 = arith.constant 0 : i32
    return %c0_i32, %c0_i32_0, %c0_i32_1 : i32, i32, i32
  }
  func.func @transform_2(%arg0: i32) -> (i32, i32, i32) {
    %c0_i32 = arith.constant 0 : i32
    %c0_i32_0 = arith.constant 0 : i32
    %c0_i32_1 = arith.constant 0 : i32
    %c0_i32_2 = arith.constant 0 : i32
    return %c0_i32, %c0_i32_0, %c0_i32_1 : i32, i32, i32
  }
  func.func @transform_3(%arg0: i32) -> (i32, i32, i32) {
    %c0_i32 = arith.constant 0 : i32
    %c0_i32_0 = arith.constant 0 : i32
    %c0_i32_1 = arith.constant 0 : i32
    %c0_i32_2 = arith.constant 0 : i32
    return %c0_i32, %c0_i32_0, %c0_i32_1 : i32, i32, i32
  }
}

</mosaic_0001>

<llo_original>
// kernel: tpu_custom_call.1
$region0: #{tpu_custom_call.1}
  #allocation0 [shape = 'u32[]', space=smem, size = 0x4, offset = 0x4, fixed_abs, tag = 'smem constant byte address 0x4 - core index']
  #allocation1 [shape = 'u32[72,128]{1,0:T(1,128)}', space=vmem, size = 0x9000, scoped, tag = 'internal scratch']
  %s0 = inlined_call_operand.hbm [shape: f32[2,4,256], index: 0, kind: input, shape index: {}]
  %s1 = inlined_call_operand.hbm [shape: f32[1,4,36], index: 1, kind: input, shape index: {}]
  %s2 = inlined_call_operand.hbm [shape: f32[1,4,36], index: 2, kind: input, shape index: {}]
  %s3 = inlined_call_operand.hbm [shape: f32[2,4,256], index: 3, kind: output, shape index: {}]
  %s4 = sld [smem:[#allocation0]]
  $region34: #{tpu_custom_call.1} parent=0
    _
  %s6 = ssub.s32 1, %s4
  %s7 = scalar_select 0, %s6, %s4
  $region1: #{tpu_custom_call.1} parent=0
    #allocation2 [shape = 'u8[8192]{0}', space=vmem, size = 0x2000, scoped, tag = 'input window, operand 0, single buffered']
    #allocation3 [shape = 's32[1]{0}', space=sflag, size = 0x4, scoped, tag = 'scoped memory for tpu_custom_call.1']
    #allocation4 [shape = 's32[1]{0}', space=sflag, size = 0x4, scoped, tag = 'scoped memory for tpu_custom_call.1']
    #allocation5 [shape = 'u8[2048]{0}', space=vmem, size = 0x800, scoped, tag = 'input window, operand 1, single buffered']
    #allocation6 [shape = 's32[1]{0}', space=sflag, size = 0x4, scoped, tag = 'scoped memory for tpu_custom_call.1']
    #allocation7 [shape = 'u8[2048]{0}', space=vmem, size = 0x800, scoped, tag = 'input window, operand 2, single buffered']
    #allocation8 [shape = 'u8[8192]{0}', space=vmem, size = 0x2000, scoped, tag = 'output window, operand 0, single buffered']
    %8 = vsyncpa [#allocation3], 0
    %9 = vsyncpa [#allocation6], 0
    %10 = vsyncpa [#allocation4], 0
    // Predicated region
    $region2: #{tpu_custom_call.1} parent=1 // pred_check
      _
    $region3: #{tpu_custom_call.1} parent=1 // pred_check_branch
      %12 = sbr.rel (0) target = $region5
    $region4: #{tpu_custom_call.1} parent=1 // pred_region
      %14 = vsyncadd [#allocation3], 0
      %s15 = sshll.u32 %s0, 4
      %s16 = int_to_ptr.hbm [resolvable:$true] %s15
      %s17 = sshll.u32 [#allocation2], 4
      %s18 = int_to_ptr.vmem [resolvable:$true] %s17
      %23 = dma.hbm_to_vmem [thread:$0]  %s16, 256, %s18, [#allocation3], 128, 128, 8
    $region5: #{tpu_custom_call.1} parent=1 // pred_fallthru
      _
    // Predicated region
    $region6: #{tpu_custom_call.1} parent=1 // pred_check
      _
    $region7: #{tpu_custom_call.1} parent=1 // pred_check_branch
      %25 = sbr.rel (0) target = $region9
    $region8: #{tpu_custom_call.1} parent=1 // pred_region
      %27 = vsyncadd [#allocation6], 0
      %s29 = sshll.u32 %s1, 4
      %s30 = int_to_ptr.hbm [resolvable:$true] %s29
      %s31 = sshll.u32 [#allocation5], 4
      %s32 = int_to_ptr.vmem [resolvable:$true] %s31
      %34 = dma.hbm_to_vmem [thread:$0]  %s30, 64, %s32, [#allocation6]
    $region9: #{tpu_custom_call.1} parent=1 // pred_fallthru
      _
    // Predicated region
    $region10: #{tpu_custom_call.1} parent=1 // pred_check
      _
    $region11: #{tpu_custom_call.1} parent=1 // pred_check_branch
      %36 = sbr.rel (0) target = $region13
    $region12: #{tpu_custom_call.1} parent=1 // pred_region
      %38 = vsyncadd [#allocation6], 0
      %s40 = sshll.u32 %s2, 4
      %s41 = int_to_ptr.hbm [resolvable:$true] %s40
      %s42 = sshll.u32 [#allocation7], 4
      %s43 = int_to_ptr.vmem [resolvable:$true] %s42
      %45 = dma.hbm_to_vmem [thread:$0]  %s41, 64, %s43, [#allocation6]
    $region13: #{tpu_custom_call.1} parent=1 // pred_fallthru
      _
    // Predicated region
    $region14: #{tpu_custom_call.1} parent=1 // pred_check
      _
    $region15: #{tpu_custom_call.1} parent=1 // pred_check_branch
      %47 = sbr.rel (0) target = $region17
    $region16: #{tpu_custom_call.1} parent=1 // pred_region
      %49 = dma.done [#allocation3], 256
    $region17: #{tpu_custom_call.1} parent=1 // pred_fallthru
      _
    // Predicated region
    $region18: #{tpu_custom_call.1} parent=1 // pred_check
      _
    $region19: #{tpu_custom_call.1} parent=1 // pred_check_branch
      %51 = sbr.rel (0) target = $region21
    $region20: #{tpu_custom_call.1} parent=1 // pred_region
      %53 = dma.done [#allocation6], 64
    $region21: #{tpu_custom_call.1} parent=1 // pred_fallthru
      _
    // Predicated region
    $region22: #{tpu_custom_call.1} parent=1 // pred_check
      _
    $region23: #{tpu_custom_call.1} parent=1 // pred_check_branch
      %55 = sbr.rel (0) target = $region25
    $region24: #{tpu_custom_call.1} parent=1 // pred_region
      %57 = dma.done [#allocation6], 64
    $region25: #{tpu_custom_call.1} parent=1 // pred_fallthru
      _
    %v58 = vld [vmem:[#allocation2] sm:$0xff]
    %v59 = vld [vmem:[#allocation2 + $0x8] sm:$0xff]
    %v60 = vld [vmem:[#allocation5] sm:$0xf]
    %v61 = vld [vmem:[#allocation7] sm:$0xf]
    %v62 = vlaneseq
    %v63 = vand.u32 %v62, 127
    %v64 = vadd.s32 %v63, 128
    %vm65 = vcmp.lt.s32.totalorder %v63, 0
    %v66 = vsub.s32 0, %v63
    %v67 = vsel %vm65, %v66, %v63
    %v68 = vshrl.u32 %v67, 4
    %v69 = vand.u32 %v67, 15
    %v70 = vsub.s32 0, %v69
    %v71 = vsel %vm65, %v70, %v69
    %vm72 = vcmp.lt.s32.totalorder %v64, 0
    %v73 = vsub.s32 0, %v64
    %v74 = vsel %vm72, %v73, %v64
    %v75 = vshrl.u32 %v74, 4
    %v76 = vand.u32 %v74, 15
    %v77 = vsub.s32 0, %v76
    %v78 = vsel %vm72, %v77, %v76
    %vm79 = vcmp.ne.s32.totalorder %v71, 0
    %vm80 = vcmp.ne.s32.totalorder %v78, 0
    %vm81 = vcmp.lt.s32.totalorder %v71, 0
    %vm82 = vcmp.lt.s32.totalorder %v78, 0
    %vm83 = vmand %vm81, %vm79
    %vm84 = vmand %vm82, %vm80
    %v85 = vadd.s32 %v71, 16
    %v86 = vadd.s32 %v78, 16
    %v87 = vsel %vm83, %v85, %v71
    %v88 = vsel %vm84, %v86, %v78
    %vm89 = vcmp.ge.s32.totalorder %v63, 16
    %vm90 = vcmp.ge.s32.totalorder %v64, 16
    %vm91 = vcmp.lt.s32.totalorder %v63, 240
    %vm92 = vcmp.lt.s32.totalorder %v64, 240
    %vm93 = vcmp.ge.s32.totalorder %v87, 1
    %vm94 = vcmp.ge.s32.totalorder %v88, 1
    %vm95 = vcmp.le.s32.totalorder %v87, 14
    %vm96 = vcmp.le.s32.totalorder %v88, 14
    %vm97 = vmand %vm89, %vm93
    %vm98 = vmand %vm90, %vm94
    %vm99 = vmand %vm89, %vm95
    %vm100 = vmand %vm90, %vm96
    %vm101 = vmand %vm91, %vm93
    %vm102 = vmand %vm92, %vm94
    %vm103 = vmand %vm91, %vm95
    %vm104 = vmand %vm92, %vm96
    %107 = vst [vmem:[#allocation1] ss:$2 sm:$0xff] %v58
    %v108 = vld.sshfl [vmem:[#allocation1] sm:$0xff pattern:$0x75316420]
    %v109 = vld.sshfl [vmem:[#allocation1 + $0x8] sm:$0xff pattern:$0x75316420]
    %s110 = scalar_lea.vmem [#allocation1], 16
    %111 = vst [vmem:[%s110] ss:$2 sm:$0xff] %v59
    %v112 = vld.sshfl [vmem:[#allocation1 + $0x10] sm:$0xff pattern:$0x75316420]
    %v113 = vld.sshfl [vmem:[#allocation1 + $0x18] sm:$0xff pattern:$0x75316420]
    %118 = vrot.lane.b32.xlu0 %v108, 17
    %v119 = vpop.permute.xlu0 %118
    %120 = vrot.lane.b32.xlu0 %v112, 17
    %v121 = vpop.permute.xlu0 %120
    %122 = vrot.lane.b32.xlu0 %v109, 17
    %v123 = vpop.permute.xlu0 %122
    %124 = vrot.lane.b32.xlu0 %v113, 17
    %v125 = vpop.permute.xlu0 %124
    %vm126 = vcmp.lt.s32.totalorder %v63, 17
    %v127 = vsel %vm126, %v119, %v123
    %v128 = vsel %vm126, %v121, %v125
    %v129 = vsel %vm126, %v123, %v119
    %v130 = vsel %vm126, %v125, %v121
    %v131 = vsel %vm97, 1, 0
    %v132 = vsel %vm98, 1, 0
    %vm133 = vcmp.eq.s32.totalorder %v131, 1
    %vm134 = vcmp.eq.s32.totalorder %v132, 1
    %v135 = vsel %vm133, %v129, 0.0
    %v136 = vsel %vm134, %v127, 0.0
    %v137 = vsel %vm133, %v130, 0.0
    %v138 = vsel %vm134, %v128, 0.0
    %140 = vset.pattern.permute.xlu0 0
    %141 = vperm.xlu0 %140, %v60
    %v142 = vpop.permute.xlu0 %141
    %v144 = vperm.slane %v135, 0
    %v145 = vperm.slane %v136, 0
    %v146 = vperm.slane %v137, 0
    %v147 = vperm.slane %v138, 0
    %v148 = vmul.f32 %v142, %v144
    %v149 = vmul.f32 %v142, %v145
    %v150 = vmul.f32 %v142, %v146
    %v151 = vmul.f32 %v142, %v147
    %v152 = vadd.f32 %v148, 0.0
    %v153 = vadd.f32 %v149, 0.0
    %v154 = vadd.f32 %v150, 0.0
    %v155 = vadd.f32 %v151, 0.0
    %156 = vset.pattern.permute.xlu0 9
    %157 = vperm.xlu0 %156, %v60
    %v158 = vpop.permute.xlu0 %157
    %v160 = vperm.slane %v135, 1
    %v161 = vperm.slane %v136, 1
    %v162 = vperm.slane %v137, 1
    %v163 = vperm.slane %v138, 1
    %v164 = vmul.f32 %v158, %v160
    %v165 = vmul.f32 %v158, %v161
    %v166 = vmul.f32 %v158, %v162
    %v167 = vmul.f32 %v158, %v163
    %v168 = vadd.f32 %v152, %v164
    %v169 = vadd.f32 %v153, %v165
    %v170 = vadd.f32 %v154, %v166
    %v171 = vadd.f32 %v155, %v167
    %172 = vset.pattern.permute.xlu0 18
    %173 = vperm.xlu0 %172, %v60
    %v174 = vpop.permute.xlu0 %173
    %v176 = vperm.slane %v135, 2
    %v177 = vperm.slane %v136, 2
    %v178 = vperm.slane %v137, 2
    %v179 = vperm.slane %v138, 2
    %v180 = vmul.f32 %v174, %v176
    %v181 = vmul.f32 %v174, %v177
    %v182 = vmul.f32 %v174, %v178
    %v183 = vmul.f32 %v174, %v179
    %v184 = vadd.f32 %v168, %v180
    %v185 = vadd.f32 %v169, %v181
    %v186 = vadd.f32 %v170, %v182
    %v187 = vadd.f32 %v171, %v183
    %188 = vset.pattern.permute.xlu0 27
    %189 = vperm.xlu0 %188, %v60
    %v190 = vpop.permute.xlu0 %189
    %v192 = vperm.slane %v135, 3
    %v193 = vperm.slane %v136, 3
    %v194 = vperm.slane %v137, 3
    %v195 = vperm.slane %v138, 3
    %v196 = vmul.f32 %v190, %v192
    %v197 = vmul.f32 %v190, %v193
    %v198 = vmul.f32 %v190, %v194
    %v199 = vmul.f32 %v190, %v195
    %v200 = vadd.f32 %v184, %v196
    %v201 = vadd.f32 %v185, %v197
    %v202 = vadd.f32 %v186, %v198
    %v203 = vadd.f32 %v187, %v199
    %204 = vst [vmem:[#allocation1] ss:$2 sm:$0xff] %v58
    %v205 = vld.sshfl [vmem:[#allocation1] sm:$0xff pattern:$0x75316420]
    %v206 = vld.sshfl [vmem:[#allocation1 + $0x8] sm:$0xff pattern:$0x75316420]
    %s207 = scalar_lea.vmem [#allocation1], 16
    %208 = vst [vmem:[%s207] ss:$2 sm:$0xff] %v59
    %v209 = vld.sshfl [vmem:[#allocation1 + $0x10] sm:$0xff pattern:$0x75316420]
    %v210 = vld.sshfl [vmem:[#allocation1 + $0x18] sm:$0xff pattern:$0x75316420]
    %215 = vrot.lane.b32.xlu0 %v205, 16
    %v216 = vpop.permute.xlu0 %215
    %217 = vrot.lane.b32.xlu0 %v209, 16
    %v218 = vpop.permute.xlu0 %217
    %219 = vrot.lane.b32.xlu0 %v206, 16
    %v220 = vpop.permute.xlu0 %219
    %221 = vrot.lane.b32.xlu0 %v210, 16
    %v222 = vpop.permute.xlu0 %221
    %vm223 = vcmp.lt.s32.totalorder %v63, 16
    %v224 = vsel %vm223, %v216, %v220
    %v225 = vsel %vm223, %v218, %v222
    %v226 = vsel %vm223, %v220, %v216
    %v227 = vsel %vm223, %v222, %v218
    %v228 = vsel %vm89, 1, 0
    %v229 = vsel %vm90, 1, 0
    %vm230 = vcmp.eq.s32.totalorder %v228, 1
    %vm231 = vcmp.eq.s32.totalorder %v229, 1
    %v232 = vsel %vm230, %v226, 0.0
    %v233 = vsel %vm231, %v224, 0.0
    %v234 = vsel %vm230, %v227, 0.0
    %v235 = vsel %vm231, %v225, 0.0
    %236 = vset.pattern.permute.xlu0 1
    %237 = vperm.xlu0 %236, %v60
    %v238 = vpop.permute.xlu0 %237
    %v240 = vperm.slane %v232, 0
    %v241 = vperm.slane %v233, 0
    %v242 = vperm.slane %v234, 0
    %v243 = vperm.slane %v235, 0
    %v244 = vmul.f32 %v238, %v240
    %v245 = vmul.f32 %v238, %v241
    %v246 = vmul.f32 %v238, %v242
    %v247 = vmul.f32 %v238, %v243
    %v248 = vadd.f32 %v200, %v244
    %v249 = vadd.f32 %v201, %v245
    %v250 = vadd.f32 %v202, %v246
    %v251 = vadd.f32 %v203, %v247
    %252 = vset.pattern.permute.xlu0 10
    %253 = vperm.xlu0 %252, %v60
    %v254 = vpop.permute.xlu0 %253
    %v256 = vperm.slane %v232, 1
    %v257 = vperm.slane %v233, 1
    %v258 = vperm.slane %v234, 1
    %v259 = vperm.slane %v235, 1
    %v260 = vmul.f32 %v254, %v256
    %v261 = vmul.f32 %v254, %v257
    %v262 = vmul.f32 %v254, %v258
    %v263 = vmul.f32 %v254, %v259
    %v264 = vadd.f32 %v248, %v260
    %v265 = vadd.f32 %v249, %v261
    %v266 = vadd.f32 %v250, %v262
    %v267 = vadd.f32 %v251, %v263
    %268 = vset.pattern.permute.xlu0 19
    %269 = vperm.xlu0 %268, %v60
    %v270 = vpop.permute.xlu0 %269
    %v272 = vperm.slane %v232, 2
    %v273 = vperm.slane %v233, 2
    %v274 = vperm.slane %v234, 2
    %v275 = vperm.slane %v235, 2
    %v276 = vmul.f32 %v270, %v272
    %v277 = vmul.f32 %v270, %v273
    %v278 = vmul.f32 %v270, %v274
    %v279 = vmul.f32 %v270, %v275
    %v280 = vadd.f32 %v264, %v276
    %v281 = vadd.f32 %v265, %v277
    %v282 = vadd.f32 %v266, %v278
    %v283 = vadd.f32 %v267, %v279
    %284 = vset.pattern.permute.xlu0 28
    %285 = vperm.xlu0 %284, %v60
    %v286 = vpop.permute.xlu0 %285
    %v288 = vperm.slane %v232, 3
    %v289 = vperm.slane %v233, 3
    %v290 = vperm.slane %v234, 3
    %v291 = vperm.slane %v235, 3
    %v292 = vmul.f32 %v286, %v288
    %v293 = vmul.f32 %v286, %v289
    %v294 = vmul.f32 %v286, %v290
    %v295 = vmul.f32 %v286, %v291
    %v296 = vadd.f32 %v280, %v292
    %v297 = vadd.f32 %v281, %v293
    %v298 = vadd.f32 %v282, %v294
    %v299 = vadd.f32 %v283, %v295
    %300 = vst [vmem:[#allocation1] ss:$2 sm:$0xff] %v58
    %v301 = vld.sshfl [vmem:[#allocation1] sm:$0xff pattern:$0x75316420]
    %v302 = vld.sshfl [vmem:[#allocation1 + $0x8] sm:$0xff pattern:$0x75316420]
    %s303 = scalar_lea.vmem [#allocation1], 16
    %304 = vst [vmem:[%s303] ss:$2 sm:$0xff] %v59
    %v305 = vld.sshfl [vmem:[#allocation1 + $0x10] sm:$0xff pattern:$0x75316420]
    %v306 = vld.sshfl [vmem:[#allocation1 + $0x18] sm:$0xff pattern:$0x75316420]
    %311 = vrot.lane.b32.xlu0 %v301, 15
    %v312 = vpop.permute.xlu0 %311
    %313 = vrot.lane.b32.xlu0 %v305, 15
    %v314 = vpop.permute.xlu0 %313
    %315 = vrot.lane.b32.xlu0 %v302, 15
    %v316 = vpop.permute.xlu0 %315
    %317 = vrot.lane.b32.xlu0 %v306, 15
    %v318 = vpop.permute.xlu0 %317
    %vm319 = vcmp.lt.s32.totalorder %v63, 15
    %v320 = vsel %vm319, %v312, %v316
    %v321 = vsel %vm319, %v314, %v318
    %v322 = vsel %vm319, %v316, %v312
    %v323 = vsel %vm319, %v318, %v314
    %v324 = vsel %vm99, 1, 0
    %v325 = vsel %vm100, 1, 0
    %vm326 = vcmp.eq.s32.totalorder %v324, 1
    %vm327 = vcmp.eq.s32.totalorder %v325, 1
    %v328 = vsel %vm326, %v322, 0.0
    %v329 = vsel %vm327, %v320, 0.0
    %v330 = vsel %vm326, %v323, 0.0
    %v331 = vsel %vm327, %v321, 0.0
    %332 = vset.pattern.permute.xlu0 2
    %333 = vperm.xlu0 %332, %v60
    %v334 = vpop.permute.xlu0 %333
    %v336 = vperm.slane %v328, 0
    %v337 = vperm.slane %v329, 0
    %v338 = vperm.slane %v330, 0
    %v339 = vperm.slane %v331, 0
    %v340 = vmul.f32 %v334, %v336
    %v341 = vmul.f32 %v334, %v337
    %v342 = vmul.f32 %v334, %v338
    %v343 = vmul.f32 %v334, %v339
    %v344 = vadd.f32 %v296, %v340
    %v345 = vadd.f32 %v297, %v341
    %v346 = vadd.f32 %v298, %v342
    %v347 = vadd.f32 %v299, %v343
    %348 = vset.pattern.permute.xlu0 11
    %349 = vperm.xlu0 %348, %v60
    %v350 = vpop.permute.xlu0 %349
    %v352 = vperm.slane %v328, 1
    %v353 = vperm.slane %v329, 1
    %v354 = vperm.slane %v330, 1
    %v355 = vperm.slane %v331, 1
    %v356 = vmul.f32 %v350, %v352
    %v357 = vmul.f32 %v350, %v353
    %v358 = vmul.f32 %v350, %v354
    %v359 = vmul.f32 %v350, %v355
    %v360 = vadd.f32 %v344, %v356
    %v361 = vadd.f32 %v345, %v357
    %v362 = vadd.f32 %v346, %v358
    %v363 = vadd.f32 %v347, %v359
    %364 = vset.pattern.permute.xlu0 20
    %365 = vperm.xlu0 %364, %v60
    %v366 = vpop.permute.xlu0 %365
    %v368 = vperm.slane %v328, 2
    %v369 = vperm.slane %v329, 2
    %v370 = vperm.slane %v330, 2
    %v371 = vperm.slane %v331, 2
    %v372 = vmul.f32 %v366, %v368
    %v373 = vmul.f32 %v366, %v369
    %v374 = vmul.f32 %v366, %v370
    %v375 = vmul.f32 %v366, %v371
    %v376 = vadd.f32 %v360, %v372
    %v377 = vadd.f32 %v361, %v373
    %v378 = vadd.f32 %v362, %v374
    %v379 = vadd.f32 %v363, %v375
    %380 = vset.pattern.permute.xlu0 29
    %381 = vperm.xlu0 %380, %v60
    %v382 = vpop.permute.xlu0 %381
    %v384 = vperm.slane %v328, 3
    %v385 = vperm.slane %v329, 3
    %v386 = vperm.slane %v330, 3
    %v387 = vperm.slane %v331, 3
    %v388 = vmul.f32 %v382, %v384
    %v389 = vmul.f32 %v382, %v385
    %v390 = vmul.f32 %v382, %v386
    %v391 = vmul.f32 %v382, %v387
    %v392 = vadd.f32 %v376, %v388
    %v393 = vadd.f32 %v377, %v389
    %v394 = vadd.f32 %v378, %v390
    %v395 = vadd.f32 %v379, %v391
    %396 = vst [vmem:[#allocation1] ss:$2 sm:$0xff] %v58
    %v397 = vld.sshfl [vmem:[#allocation1] sm:$0xff pattern:$0x75316420]
    %v398 = vld.sshfl [vmem:[#allocation1 + $0x8] sm:$0xff pattern:$0x75316420]
    %s399 = scalar_lea.vmem [#allocation1], 16
    %400 = vst [vmem:[%s399] ss:$2 sm:$0xff] %v59
    %v401 = vld.sshfl [vmem:[#allocation1 + $0x10] sm:$0xff pattern:$0x75316420]
    %v402 = vld.sshfl [vmem:[#allocation1 + $0x18] sm:$0xff pattern:$0x75316420]
    %407 = vrot.lane.b32.xlu0 %v397, 1
    %v408 = vpop.permute.xlu0 %407
    %409 = vrot.lane.b32.xlu0 %v401, 1
    %v410 = vpop.permute.xlu0 %409
    %411 = vrot.lane.b32.xlu0 %v398, 1
    %v412 = vpop.permute.xlu0 %411
    %413 = vrot.lane.b32.xlu0 %v402, 1
    %v414 = vpop.permute.xlu0 %413
    %vm415 = vcmp.lt.s32.totalorder %v63, 1
    %v416 = vsel %vm415, %v408, %v412
    %v417 = vsel %vm415, %v410, %v414
    %v418 = vsel %vm415, %v412, %v408
    %v419 = vsel %vm415, %v414, %v410
    %v420 = vsel %vm93, 1, 0
    %v421 = vsel %vm94, 1, 0
    %vm422 = vcmp.eq.s32.totalorder %v420, 1
    %vm423 = vcmp.eq.s32.totalorder %v421, 1
    %v424 = vsel %vm422, %v418, 0.0
    %v425 = vsel %vm423, %v416, 0.0
    %v426 = vsel %vm422, %v419, 0.0
    %v427 = vsel %vm423, %v417, 0.0
    %428 = vset.pattern.permute.xlu0 3
    %429 = vperm.xlu0 %428, %v60
    %v430 = vpop.permute.xlu0 %429
    %v432 = vperm.slane %v424, 0
    %v433 = vperm.slane %v425, 0
    %v434 = vperm.slane %v426, 0
    %v435 = vperm.slane %v427, 0
    %v436 = vmul.f32 %v430, %v432
    %v437 = vmul.f32 %v430, %v433
    %v438 = vmul.f32 %v430, %v434
    %v439 = vmul.f32 %v430, %v435
    %v440 = vadd.f32 %v392, %v436
    %v441 = vadd.f32 %v393, %v437
    %v442 = vadd.f32 %v394, %v438
    %v443 = vadd.f32 %v395, %v439
    %444 = vset.pattern.permute.xlu0 12
    %445 = vperm.xlu0 %444, %v60
    %v446 = vpop.permute.xlu0 %445
    %v448 = vperm.slane %v424, 1
    %v449 = vperm.slane %v425, 1
    %v450 = vperm.slane %v426, 1
    %v451 = vperm.slane %v427, 1
    %v452 = vmul.f32 %v446, %v448
    %v453 = vmul.f32 %v446, %v449
    %v454 = vmul.f32 %v446, %v450
    %v455 = vmul.f32 %v446, %v451
    %v456 = vadd.f32 %v440, %v452
    %v457 = vadd.f32 %v441, %v453
    %v458 = vadd.f32 %v442, %v454
    %v459 = vadd.f32 %v443, %v455
    %460 = vset.pattern.permute.xlu0 21
    %461 = vperm.xlu0 %460, %v60
    %v462 = vpop.permute.xlu0 %461
    %v464 = vperm.slane %v424, 2
    %v465 = vperm.slane %v425, 2
    %v466 = vperm.slane %v426, 2
    %v467 = vperm.slane %v427, 2
    %v468 = vmul.f32 %v462, %v464
    %v469 = vmul.f32 %v462, %v465
    %v470 = vmul.f32 %v462, %v466
    %v471 = vmul.f32 %v462, %v467
    %v472 = vadd.f32 %v456, %v468
    %v473 = vadd.f32 %v457, %v469
    %v474 = vadd.f32 %v458, %v470
    %v475 = vadd.f32 %v459, %v471
    %476 = vset.pattern.permute.xlu0 30
    %477 = vperm.xlu0 %476, %v60
    %v478 = vpop.permute.xlu0 %477
    %v480 = vperm.slane %v424, 3
    %v481 = vperm.slane %v425, 3
    %v482 = vperm.slane %v426, 3
    %v483 = vperm.slane %v427, 3
    %v484 = vmul.f32 %v478, %v480
    %v485 = vmul.f32 %v478, %v481
    %v486 = vmul.f32 %v478, %v482
    %v487 = vmul.f32 %v478, %v483
    %v488 = vadd.f32 %v472, %v484
    %v489 = vadd.f32 %v473, %v485
    %v490 = vadd.f32 %v474, %v486
    %v491 = vadd.f32 %v475, %v487
    %492 = vset.pattern.permute.xlu0 4
    %493 = vperm.xlu0 %492, %v60
    %v494 = vpop.permute.xlu0 %493
    %v496 = vperm.slane %v58, 0
    %v497 = vperm.slane %v58, 4
    %v498 = vperm.slane %v59, 0
    %v499 = vperm.slane %v59, 4
    %v504 = vperm.slane %v496, 0
    %v505 = vperm.slane %v497, 0
    %v506 = vperm.slane %v498, 0
    %v507 = vperm.slane %v499, 0
    %v508 = vmul.f32 %v494, %v504
    %v509 = vmul.f32 %v494, %v505
    %v510 = vmul.f32 %v494, %v506
    %v511 = vmul.f32 %v494, %v507
    %v512 = vadd.f32 %v488, %v508
    %v513 = vadd.f32 %v489, %v509
    %v514 = vadd.f32 %v490, %v510
    %v515 = vadd.f32 %v491, %v511
    %516 = vset.pattern.permute.xlu0 13
    %517 = vperm.xlu0 %516, %v60
    %v518 = vpop.permute.xlu0 %517
    %v520 = vperm.slane %v58, 1
    %v521 = vperm.slane %v58, 5
    %v522 = vperm.slane %v59, 1
    %v523 = vperm.slane %v59, 5
    %v528 = vperm.slane %v520, 1
    %v529 = vperm.slane %v521, 1
    %v530 = vperm.slane %v522, 1
    %v531 = vperm.slane %v523, 1
    %v532 = vmul.f32 %v518, %v528
    %v533 = vmul.f32 %v518, %v529
    %v534 = vmul.f32 %v518, %v530
    %v535 = vmul.f32 %v518, %v531
    %v536 = vadd.f32 %v512, %v532
    %v537 = vadd.f32 %v513, %v533
    %v538 = vadd.f32 %v514, %v534
    %v539 = vadd.f32 %v515, %v535
    %540 = vset.pattern.permute.xlu0 22
    %541 = vperm.xlu0 %540, %v60
    %v542 = vpop.permute.xlu0 %541
    %v544 = vperm.slane %v58, 2
    %v545 = vperm.slane %v58, 6
    %v546 = vperm.slane %v59, 2
    %v547 = vperm.slane %v59, 6
    %v552 = vperm.slane %v544, 2
    %v553 = vperm.slane %v545, 2
    %v554 = vperm.slane %v546, 2
    %v555 = vperm.slane %v547, 2
    %v556 = vmul.f32 %v542, %v552
    %v557 = vmul.f32 %v542, %v553
    %v558 = vmul.f32 %v542, %v554
    %v559 = vmul.f32 %v542, %v555
    %v560 = vadd.f32 %v536, %v556
    %v561 = vadd.f32 %v537, %v557
    %v562 = vadd.f32 %v538, %v558
    %v563 = vadd.f32 %v539, %v559
    %564 = vset.pattern.permute.xlu0 31
    %565 = vperm.xlu0 %564, %v60
    %v566 = vpop.permute.xlu0 %565
    %v568 = vperm.slane %v58, 3
    %v569 = vperm.slane %v58, 7
    %v570 = vperm.slane %v59, 3
    %v571 = vperm.slane %v59, 7
    %v576 = vperm.slane %v568, 3
    %v577 = vperm.slane %v569, 3
    %v578 = vperm.slane %v570, 3
    %v579 = vperm.slane %v571, 3
    %v580 = vmul.f32 %v566, %v576
    %v581 = vmul.f32 %v566, %v577
    %v582 = vmul.f32 %v566, %v578
    %v583 = vmul.f32 %v566, %v579
    %v584 = vadd.f32 %v560, %v580
    %v585 = vadd.f32 %v561, %v581
    %v586 = vadd.f32 %v562, %v582
    %v587 = vadd.f32 %v563, %v583
    %588 = vst [vmem:[#allocation1] ss:$2 sm:$0xff] %v58
    %v589 = vld.sshfl [vmem:[#allocation1] sm:$0xff pattern:$0x75316420]
    %v590 = vld.sshfl [vmem:[#allocation1 + $0x8] sm:$0xff pattern:$0x75316420]
    %s591 = scalar_lea.vmem [#allocation1], 16
    %592 = vst [vmem:[%s591] ss:$2 sm:$0xff] %v59
    %v593 = vld.sshfl [vmem:[#allocation1 + $0x10] sm:$0xff pattern:$0x75316420]
    %v594 = vld.sshfl [vmem:[#allocation1 + $0x18] sm:$0xff pattern:$0x75316420]
    %599 = vrot.lane.b32.xlu0 %v589, 127
    %v600 = vpop.permute.xlu0 %599
    %601 = vrot.lane.b32.xlu0 %v593, 127
    %v602 = vpop.permute.xlu0 %601
    %603 = vrot.lane.b32.xlu0 %v590, 127
    %v604 = vpop.permute.xlu0 %603
    %605 = vrot.lane.b32.xlu0 %v594, 127
    %v606 = vpop.permute.xlu0 %605
    %vm607 = vcmp.lt.s32.totalorder %v63, 127
    %v608 = vsel %vm607, %v600, %v604
    %v609 = vsel %vm607, %v602, %v606
    %v610 = vsel %vm607, %v604, %v600
    %v611 = vsel %vm607, %v606, %v602
    %v612 = vsel %vm95, 1, 0
    %v613 = vsel %vm96, 1, 0
    %vm614 = vcmp.eq.s32.totalorder %v612, 1
    %vm615 = vcmp.eq.s32.totalorder %v613, 1
    %v616 = vsel %vm614, %v608, 0.0
    %v617 = vsel %vm615, %v610, 0.0
    %v618 = vsel %vm614, %v609, 0.0
    %v619 = vsel %vm615, %v611, 0.0
    %620 = vset.pattern.permute.xlu0 5
    %621 = vperm.xlu0 %620, %v60
    %v622 = vpop.permute.xlu0 %621
    %v624 = vperm.slane %v616, 0
    %v625 = vperm.slane %v617, 0
    %v626 = vperm.slane %v618, 0
    %v627 = vperm.slane %v619, 0
    %v628 = vmul.f32 %v622, %v624
    %v629 = vmul.f32 %v622, %v625
    %v630 = vmul.f32 %v622, %v626
    %v631 = vmul.f32 %v622, %v627
    %v632 = vadd.f32 %v584, %v628
    %v633 = vadd.f32 %v585, %v629
    %v634 = vadd.f32 %v586, %v630
    %v635 = vadd.f32 %v587, %v631
    %636 = vset.pattern.permute.xlu0 14
    %637 = vperm.xlu0 %636, %v60
    %v638 = vpop.permute.xlu0 %637
    %v640 = vperm.slane %v616, 1
    %v641 = vperm.slane %v617, 1
    %v642 = vperm.slane %v618, 1
    %v643 = vperm.slane %v619, 1
    %v644 = vmul.f32 %v638, %v640
    %v645 = vmul.f32 %v638, %v641
    %v646 = vmul.f32 %v638, %v642
    %v647 = vmul.f32 %v638, %v643
    %v648 = vadd.f32 %v632, %v644
    %v649 = vadd.f32 %v633, %v645
    %v650 = vadd.f32 %v634, %v646
    %v651 = vadd.f32 %v635, %v647
    %652 = vset.pattern.permute.xlu0 23
    %653 = vperm.xlu0 %652, %v60
    %v654 = vpop.permute.xlu0 %653
    %v656 = vperm.slane %v616, 2
    %v657 = vperm.slane %v617, 2
    %v658 = vperm.slane %v618, 2
    %v659 = vperm.slane %v619, 2
    %v660 = vmul.f32 %v654, %v656
    %v661 = vmul.f32 %v654, %v657
    %v662 = vmul.f32 %v654, %v658
    %v663 = vmul.f32 %v654, %v659
    %v664 = vadd.f32 %v648, %v660
    %v665 = vadd.f32 %v649, %v661
    %v666 = vadd.f32 %v650, %v662
    %v667 = vadd.f32 %v651, %v663
    %668 = vset.pattern.permute.xlu0 32
    %669 = vperm.xlu0 %668, %v60
    %v670 = vpop.permute.xlu0 %669
    %v672 = vperm.slane %v616, 3
    %v673 = vperm.slane %v617, 3
    %v674 = vperm.slane %v618, 3
    %v675 = vperm.slane %v619, 3
    %v676 = vmul.f32 %v670, %v672
    %v677 = vmul.f32 %v670, %v673
    %v678 = vmul.f32 %v670, %v674
    %v679 = vmul.f32 %v670, %v675
    %v680 = vadd.f32 %v664, %v676
    %v681 = vadd.f32 %v665, %v677
    %v682 = vadd.f32 %v666, %v678
    %v683 = vadd.f32 %v667, %v679
    %684 = vst [vmem:[#allocation1] ss:$2 sm:$0xff] %v58
    %v685 = vld.sshfl [vmem:[#allocation1] sm:$0xff pattern:$0x75316420]
    %v686 = vld.sshfl [vmem:[#allocation1 + $0x8] sm:$0xff pattern:$0x75316420]
    %s687 = scalar_lea.vmem [#allocation1], 16
    %688 = vst [vmem:[%s687] ss:$2 sm:$0xff] %v59
    %v689 = vld.sshfl [vmem:[#allocation1 + $0x10] sm:$0xff pattern:$0x75316420]
    %v690 = vld.sshfl [vmem:[#allocation1 + $0x18] sm:$0xff pattern:$0x75316420]
    %695 = vrot.lane.b32.xlu0 %v685, 113
    %v696 = vpop.permute.xlu0 %695
    %697 = vrot.lane.b32.xlu0 %v689, 113
    %v698 = vpop.permute.xlu0 %697
    %699 = vrot.lane.b32.xlu0 %v686, 113
    %v700 = vpop.permute.xlu0 %699
    %701 = vrot.lane.b32.xlu0 %v690, 113
    %v702 = vpop.permute.xlu0 %701
    %vm703 = vcmp.lt.s32.totalorder %v63, 113
    %v704 = vsel %vm703, %v696, %v700
    %v705 = vsel %vm703, %v698, %v702
    %v706 = vsel %vm703, %v700, %v696
    %v707 = vsel %vm703, %v702, %v698
    %v708 = vsel %vm101, 1, 0
    %v709 = vsel %vm102, 1, 0
    %vm710 = vcmp.eq.s32.totalorder %v708, 1
    %vm711 = vcmp.eq.s32.totalorder %v709, 1
    %v712 = vsel %vm710, %v704, 0.0
    %v713 = vsel %vm711, %v706, 0.0
    %v714 = vsel %vm710, %v705, 0.0
    %v715 = vsel %vm711, %v707, 0.0
    %716 = vset.pattern.permute.xlu0 6
    %717 = vperm.xlu0 %716, %v60
    %v718 = vpop.permute.xlu0 %717
    %v720 = vperm.slane %v712, 0
    %v721 = vperm.slane %v713, 0
    %v722 = vperm.slane %v714, 0
    %v723 = vperm.slane %v715, 0
    %v724 = vmul.f32 %v718, %v720
    %v725 = vmul.f32 %v718, %v721
    %v726 = vmul.f32 %v718, %v722
    %v727 = vmul.f32 %v718, %v723
    %v728 = vadd.f32 %v680, %v724
    %v729 = vadd.f32 %v681, %v725
    %v730 = vadd.f32 %v682, %v726
    %v731 = vadd.f32 %v683, %v727
    %732 = vset.pattern.permute.xlu0 15
    %733 = vperm.xlu0 %732, %v60
    %v734 = vpop.permute.xlu0 %733
    %v736 = vperm.slane %v712, 1
    %v737 = vperm.slane %v713, 1
    %v738 = vperm.slane %v714, 1
    %v739 = vperm.slane %v715, 1
    %v740 = vmul.f32 %v734, %v736
    %v741 = vmul.f32 %v734, %v737
    %v742 = vmul.f32 %v734, %v738
    %v743 = vmul.f32 %v734, %v739
    %v744 = vadd.f32 %v728, %v740
    %v745 = vadd.f32 %v729, %v741
    %v746 = vadd.f32 %v730, %v742
    %v747 = vadd.f32 %v731, %v743
    %748 = vset.pattern.permute.xlu0 24
    %749 = vperm.xlu0 %748, %v60
    %v750 = vpop.permute.xlu0 %749
    %v752 = vperm.slane %v712, 2
    %v753 = vperm.slane %v713, 2
    %v754 = vperm.slane %v714, 2
    %v755 = vperm.slane %v715, 2
    %v756 = vmul.f32 %v750, %v752
    %v757 = vmul.f32 %v750, %v753
    %v758 = vmul.f32 %v750, %v754
    %v759 = vmul.f32 %v750, %v755
    %v760 = vadd.f32 %v744, %v756
    %v761 = vadd.f32 %v745, %v757
    %v762 = vadd.f32 %v746, %v758
    %v763 = vadd.f32 %v747, %v759
    %764 = vset.pattern.permute.xlu0 33
    %765 = vperm.xlu0 %764, %v60
    %v766 = vpop.permute.xlu0 %765
    %v768 = vperm.slane %v712, 3
    %v769 = vperm.slane %v713, 3
    %v770 = vperm.slane %v714, 3
    %v771 = vperm.slane %v715, 3
    %v772 = vmul.f32 %v766, %v768
    %v773 = vmul.f32 %v766, %v769
    %v774 = vmul.f32 %v766, %v770
    %v775 = vmul.f32 %v766, %v771
    %v776 = vadd.f32 %v760, %v772
    %v777 = vadd.f32 %v761, %v773
    %v778 = vadd.f32 %v762, %v774
    %v779 = vadd.f32 %v763, %v775
    %780 = vst [vmem:[#allocation1] ss:$2 sm:$0xff] %v58
    %v781 = vld.sshfl [vmem:[#allocation1] sm:$0xff pattern:$0x75316420]
    %v782 = vld.sshfl [vmem:[#allocation1 + $0x8] sm:$0xff pattern:$0x75316420]
    %s783 = scalar_lea.vmem [#allocation1], 16
    %784 = vst [vmem:[%s783] ss:$2 sm:$0xff] %v59
    %v785 = vld.sshfl [vmem:[#allocation1 + $0x10] sm:$0xff pattern:$0x75316420]
    %v786 = vld.sshfl [vmem:[#allocation1 + $0x18] sm:$0xff pattern:$0x75316420]
    %791 = vrot.lane.b32.xlu0 %v781, 112
    %v792 = vpop.permute.xlu0 %791
    %793 = vrot.lane.b32.xlu0 %v785, 112
    %v794 = vpop.permute.xlu0 %793
    %795 = vrot.lane.b32.xlu0 %v782, 112
    %v796 = vpop.permute.xlu0 %795
    %797 = vrot.lane.b32.xlu0 %v786, 112
    %v798 = vpop.permute.xlu0 %797
    %vm799 = vcmp.lt.s32.totalorder %v63, 112
    %v800 = vsel %vm799, %v792, %v796
    %v801 = vsel %vm799, %v794, %v798
    %v802 = vsel %vm799, %v796, %v792
    %v803 = vsel %vm799, %v798, %v794
    %v804 = vsel %vm91, 1, 0
    %v805 = vsel %vm92, 1, 0
    %vm806 = vcmp.eq.s32.totalorder %v804, 1
    %vm807 = vcmp.eq.s32.totalorder %v805, 1
    %v808 = vsel %vm806, %v800, 0.0
    %v809 = vsel %vm807, %v802, 0.0
    %v810 = vsel %vm806, %v801, 0.0
    %v811 = vsel %vm807, %v803, 0.0
    %812 = vset.pattern.permute.xlu0 7
    %813 = vperm.xlu0 %812, %v60
    %v814 = vpop.permute.xlu0 %813
    %v816 = vperm.slane %v808, 0
    %v817 = vperm.slane %v809, 0
    %v818 = vperm.slane %v810, 0
    %v819 = vperm.slane %v811, 0
    %v820 = vmul.f32 %v814, %v816
    %v821 = vmul.f32 %v814, %v817
    %v822 = vmul.f32 %v814, %v818
    %v823 = vmul.f32 %v814, %v819
    %v824 = vadd.f32 %v776, %v820
    %v825 = vadd.f32 %v777, %v821
    %v826 = vadd.f32 %v778, %v822
    %v827 = vadd.f32 %v779, %v823
    %828 = vset.pattern.permute.xlu0 16
    %829 = vperm.xlu0 %828, %v60
    %v830 = vpop.permute.xlu0 %829
    %v832 = vperm.slane %v808, 1
    %v833 = vperm.slane %v809, 1
    %v834 = vperm.slane %v810, 1
    %v835 = vperm.slane %v811, 1
    %v836 = vmul.f32 %v830, %v832
    %v837 = vmul.f32 %v830, %v833
    %v838 = vmul.f32 %v830, %v834
    %v839 = vmul.f32 %v830, %v835
    %v840 = vadd.f32 %v824, %v836
    %v841 = vadd.f32 %v825, %v837
    %v842 = vadd.f32 %v826, %v838
    %v843 = vadd.f32 %v827, %v839
    %844 = vset.pattern.permute.xlu0 25
    %845 = vperm.xlu0 %844, %v60
    %v846 = vpop.permute.xlu0 %845
    %v848 = vperm.slane %v808, 2
    %v849 = vperm.slane %v809, 2
    %v850 = vperm.slane %v810, 2
    %v851 = vperm.slane %v811, 2
    %v852 = vmul.f32 %v846, %v848
    %v853 = vmul.f32 %v846, %v849
    %v854 = vmul.f32 %v846, %v850
    %v855 = vmul.f32 %v846, %v851
    %v856 = vadd.f32 %v840, %v852
    %v857 = vadd.f32 %v841, %v853
    %v858 = vadd.f32 %v842, %v854
    %v859 = vadd.f32 %v843, %v855
    %860 = vset.pattern.permute.xlu0 34
    %861 = vperm.xlu0 %860, %v60
    %v862 = vpop.permute.xlu0 %861
    %v864 = vperm.slane %v808, 3
    %v865 = vperm.slane %v809, 3
    %v866 = vperm.slane %v810, 3
    %v867 = vperm.slane %v811, 3
    %v868 = vmul.f32 %v862, %v864
    %v869 = vmul.f32 %v862, %v865
    %v870 = vmul.f32 %v862, %v866
    %v871 = vmul.f32 %v862, %v867
    %v872 = vadd.f32 %v856, %v868
    %v873 = vadd.f32 %v857, %v869
    %v874 = vadd.f32 %v858, %v870
    %v875 = vadd.f32 %v859, %v871
    %876 = vst [vmem:[#allocation1] ss:$2 sm:$0xff] %v58
    %v877 = vld.sshfl [vmem:[#allocation1] sm:$0xff pattern:$0x75316420]
    %v878 = vld.sshfl [vmem:[#allocation1 + $0x8] sm:$0xff pattern:$0x75316420]
    %s879 = scalar_lea.vmem [#allocation1], 16
    %880 = vst [vmem:[%s879] ss:$2 sm:$0xff] %v59
    %v881 = vld.sshfl [vmem:[#allocation1 + $0x10] sm:$0xff pattern:$0x75316420]
    %v882 = vld.sshfl [vmem:[#allocation1 + $0x18] sm:$0xff pattern:$0x75316420]
    %887 = vrot.lane.b32.xlu0 %v877, 111
    %v888 = vpop.permute.xlu0 %887
    %889 = vrot.lane.b32.xlu0 %v881, 111
    %v890 = vpop.permute.xlu0 %889
    %891 = vrot.lane.b32.xlu0 %v878, 111
    %v892 = vpop.permute.xlu0 %891
    %893 = vrot.lane.b32.xlu0 %v882, 111
    %v894 = vpop.permute.xlu0 %893
    %vm895 = vcmp.lt.s32.totalorder %v63, 111
    %v896 = vsel %vm895, %v888, %v892
    %v897 = vsel %vm895, %v890, %v894
    %v898 = vsel %vm895, %v892, %v888
    %v899 = vsel %vm895, %v894, %v890
    %v900 = vsel %vm103, 1, 0
    %v901 = vsel %vm104, 1, 0
    %vm902 = vcmp.eq.s32.totalorder %v900, 1
    %vm903 = vcmp.eq.s32.totalorder %v901, 1
    %v904 = vsel %vm902, %v896, 0.0
    %v905 = vsel %vm903, %v898, 0.0
    %v906 = vsel %vm902, %v897, 0.0
    %v907 = vsel %vm903, %v899, 0.0
    %908 = vset.pattern.permute.xlu0 8
    %909 = vperm.xlu0 %908, %v60
    %v910 = vpop.permute.xlu0 %909
    %v912 = vperm.slane %v904, 0
    %v913 = vperm.slane %v905, 0
    %v914 = vperm.slane %v906, 0
    %v915 = vperm.slane %v907, 0
    %v916 = vmul.f32 %v910, %v912
    %v917 = vmul.f32 %v910, %v913
    %v918 = vmul.f32 %v910, %v914
    %v919 = vmul.f32 %v910, %v915
    %v920 = vadd.f32 %v872, %v916
    %v921 = vadd.f32 %v873, %v917
    %v922 = vadd.f32 %v874, %v918
    %v923 = vadd.f32 %v875, %v919
    %924 = vset.pattern.permute.xlu0 17
    %925 = vperm.xlu0 %924, %v60
    %v926 = vpop.permute.xlu0 %925
    %v928 = vperm.slane %v904, 1
    %v929 = vperm.slane %v905, 1
    %v930 = vperm.slane %v906, 1
    %v931 = vperm.slane %v907, 1
    %v932 = vmul.f32 %v926, %v928
    %v933 = vmul.f32 %v926, %v929
    %v934 = vmul.f32 %v926, %v930
    %v935 = vmul.f32 %v926, %v931
    %v936 = vadd.f32 %v920, %v932
    %v937 = vadd.f32 %v921, %v933
    %v938 = vadd.f32 %v922, %v934
    %v939 = vadd.f32 %v923, %v935
    %940 = vset.pattern.permute.xlu0 26
    %941 = vperm.xlu0 %940, %v60
    %v942 = vpop.permute.xlu0 %941
    %v944 = vperm.slane %v904, 2
    %v945 = vperm.slane %v905, 2
    %v946 = vperm.slane %v906, 2
    %v947 = vperm.slane %v907, 2
    %v948 = vmul.f32 %v942, %v944
    %v949 = vmul.f32 %v942, %v945
    %v950 = vmul.f32 %v942, %v946
    %v951 = vmul.f32 %v942, %v947
    %v952 = vadd.f32 %v936, %v948
    %v953 = vadd.f32 %v937, %v949
    %v954 = vadd.f32 %v938, %v950
    %v955 = vadd.f32 %v939, %v951
    %956 = vset.pattern.permute.xlu0 35
    %957 = vperm.xlu0 %956, %v60
    %v958 = vpop.permute.xlu0 %957
    %v960 = vperm.slane %v904, 3
    %v961 = vperm.slane %v905, 3
    %v962 = vperm.slane %v906, 3
    %v963 = vperm.slane %v907, 3
    %v964 = vmul.f32 %v958, %v960
    %v965 = vmul.f32 %v958, %v961
    %v966 = vmul.f32 %v958, %v962
    %v967 = vmul.f32 %v958, %v963
    %v968 = vadd.f32 %v952, %v964
    %v969 = vadd.f32 %v953, %v965
    %v970 = vadd.f32 %v954, %v966
    %v971 = vadd.f32 %v955, %v967
    %v972 = vmax.f32 %v968, 0.0
    %v973 = vmax.f32 %v969, 0.0
    %v974 = vmax.f32 %v970, 0.0
    %v975 = vmax.f32 %v971, 0.0
    %976 = vrot.lane.b32.xlu0 %v972, 17
    %v977 = vpop.permute.xlu0 %976
    %978 = vrot.lane.b32.xlu0 %v974, 17
    %v979 = vpop.permute.xlu0 %978
    %980 = vrot.lane.b32.xlu0 %v973, 17
    %v981 = vpop.permute.xlu0 %980
    %982 = vrot.lane.b32.xlu0 %v975, 17
    %v983 = vpop.permute.xlu0 %982
    %v984 = vsel %vm126, %v977, %v981
    %v985 = vsel %vm126, %v979, %v983
    %v986 = vsel %vm126, %v981, %v977
    %v987 = vsel %vm126, %v983, %v979
    %v988 = vsel %vm133, %v986, 0.0
    %v989 = vsel %vm134, %v984, 0.0
    %v990 = vsel %vm133, %v987, 0.0
    %v991 = vsel %vm134, %v985, 0.0
    %993 = vset.pattern.permute.xlu0 0
    %994 = vperm.xlu0 %993, %v61
    %v995 = vpop.permute.xlu0 %994
    %v997 = vperm.slane %v988, 0
    %v998 = vperm.slane %v989, 0
    %v999 = vperm.slane %v990, 0
    %v1000 = vperm.slane %v991, 0
    %v1001 = vmul.f32 %v995, %v997
    %v1002 = vmul.f32 %v995, %v998
    %v1003 = vmul.f32 %v995, %v999
    %v1004 = vmul.f32 %v995, %v1000
    %v1005 = vadd.f32 %v1001, 0.0
    %v1006 = vadd.f32 %v1002, 0.0
    %v1007 = vadd.f32 %v1003, 0.0
    %v1008 = vadd.f32 %v1004, 0.0
    %1009 = vset.pattern.permute.xlu0 9
    %1010 = vperm.xlu0 %1009, %v61
    %v1011 = vpop.permute.xlu0 %1010
    %v1013 = vperm.slane %v988, 1
    %v1014 = vperm.slane %v989, 1
    %v1015 = vperm.slane %v990, 1
    %v1016 = vperm.slane %v991, 1
    %v1017 = vmul.f32 %v1011, %v1013
    %v1018 = vmul.f32 %v1011, %v1014
    %v1019 = vmul.f32 %v1011, %v1015
    %v1020 = vmul.f32 %v1011, %v1016
    %v1021 = vadd.f32 %v1005, %v1017
    %v1022 = vadd.f32 %v1006, %v1018
    %v1023 = vadd.f32 %v1007, %v1019
    %v1024 = vadd.f32 %v1008, %v1020
    %1025 = vset.pattern.permute.xlu0 18
    %1026 = vperm.xlu0 %1025, %v61
    %v1027 = vpop.permute.xlu0 %1026
    %v1029 = vperm.slane %v988, 2
    %v1030 = vperm.slane %v989, 2
    %v1031 = vperm.slane %v990, 2
    %v1032 = vperm.slane %v991, 2
    %v1033 = vmul.f32 %v1027, %v1029
    %v1034 = vmul.f32 %v1027, %v1030
    %v1035 = vmul.f32 %v1027, %v1031
    %v1036 = vmul.f32 %v1027, %v1032
    %v1037 = vadd.f32 %v1021, %v1033
    %v1038 = vadd.f32 %v1022, %v1034
    %v1039 = vadd.f32 %v1023, %v1035
    %v1040 = vadd.f32 %v1024, %v1036
    %1041 = vset.pattern.permute.xlu0 27
    %1042 = vperm.xlu0 %1041, %v61
    %v1043 = vpop.permute.xlu0 %1042
    %v1045 = vperm.slane %v988, 3
    %v1046 = vperm.slane %v989, 3
    %v1047 = vperm.slane %v990, 3
    %v1048 = vperm.slane %v991, 3
    %v1049 = vmul.f32 %v1043, %v1045
    %v1050 = vmul.f32 %v1043, %v1046
    %v1051 = vmul.f32 %v1043, %v1047
    %v1052 = vmul.f32 %v1043, %v1048
    %v1053 = vadd.f32 %v1037, %v1049
    %v1054 = vadd.f32 %v1038, %v1050
    %v1055 = vadd.f32 %v1039, %v1051
    %v1056 = vadd.f32 %v1040, %v1052
    %1057 = vrot.lane.b32.xlu0 %v972, 16
    %v1058 = vpop.permute.xlu0 %1057
    %1059 = vrot.lane.b32.xlu0 %v974, 16
    %v1060 = vpop.permute.xlu0 %1059
    %1061 = vrot.lane.b32.xlu0 %v973, 16
    %v1062 = vpop.permute.xlu0 %1061
    %1063 = vrot.lane.b32.xlu0 %v975, 16
    %v1064 = vpop.permute.xlu0 %1063
    %v1065 = vsel %vm223, %v1058, %v1062
    %v1066 = vsel %vm223, %v1060, %v1064
    %v1067 = vsel %vm223, %v1062, %v1058
    %v1068 = vsel %vm223, %v1064, %v1060
    %v1069 = vsel %vm230, %v1067, 0.0
    %v1070 = vsel %vm231, %v1065, 0.0
    %v1071 = vsel %vm230, %v1068, 0.0
    %v1072 = vsel %vm231, %v1066, 0.0
    %1073 = vset.pattern.permute.xlu0 1
    %1074 = vperm.xlu0 %1073, %v61
    %v1075 = vpop.permute.xlu0 %1074
    %v1077 = vperm.slane %v1069, 0
    %v1078 = vperm.slane %v1070, 0
    %v1079 = vperm.slane %v1071, 0
    %v1080 = vperm.slane %v1072, 0
    %v1081 = vmul.f32 %v1075, %v1077
    %v1082 = vmul.f32 %v1075, %v1078
    %v1083 = vmul.f32 %v1075, %v1079
    %v1084 = vmul.f32 %v1075, %v1080
    %v1085 = vadd.f32 %v1053, %v1081
    %v1086 = vadd.f32 %v1054, %v1082
    %v1087 = vadd.f32 %v1055, %v1083
    %v1088 = vadd.f32 %v1056, %v1084
    %1089 = vset.pattern.permute.xlu0 10
    %1090 = vperm.xlu0 %1089, %v61
    %v1091 = vpop.permute.xlu0 %1090
    %v1093 = vperm.slane %v1069, 1
    %v1094 = vperm.slane %v1070, 1
    %v1095 = vperm.slane %v1071, 1
    %v1096 = vperm.slane %v1072, 1
    %v1097 = vmul.f32 %v1091, %v1093
    %v1098 = vmul.f32 %v1091, %v1094
    %v1099 = vmul.f32 %v1091, %v1095
    %v1100 = vmul.f32 %v1091, %v1096
    %v1101 = vadd.f32 %v1085, %v1097
    %v1102 = vadd.f32 %v1086, %v1098
    %v1103 = vadd.f32 %v1087, %v1099
    %v1104 = vadd.f32 %v1088, %v1100
    %1105 = vset.pattern.permute.xlu0 19
    %1106 = vperm.xlu0 %1105, %v61
    %v1107 = vpop.permute.xlu0 %1106
    %v1109 = vperm.slane %v1069, 2
    %v1110 = vperm.slane %v1070, 2
    %v1111 = vperm.slane %v1071, 2
    %v1112 = vperm.slane %v1072, 2
    %v1113 = vmul.f32 %v1107, %v1109
    %v1114 = vmul.f32 %v1107, %v1110
    %v1115 = vmul.f32 %v1107, %v1111
    %v1116 = vmul.f32 %v1107, %v1112
    %v1117 = vadd.f32 %v1101, %v1113
    %v1118 = vadd.f32 %v1102, %v1114
    %v1119 = vadd.f32 %v1103, %v1115
    %v1120 = vadd.f32 %v1104, %v1116
    %1121 = vset.pattern.permute.xlu0 28
    %1122 = vperm.xlu0 %1121, %v61
    %v1123 = vpop.permute.xlu0 %1122
    %v1125 = vperm.slane %v1069, 3
    %v1126 = vperm.slane %v1070, 3
    %v1127 = vperm.slane %v1071, 3
    %v1128 = vperm.slane %v1072, 3
    %v1129 = vmul.f32 %v1123, %v1125
    %v1130 = vmul.f32 %v1123, %v1126
    %v1131 = vmul.f32 %v1123, %v1127
    %v1132 = vmul.f32 %v1123, %v1128
    %v1133 = vadd.f32 %v1117, %v1129
    %v1134 = vadd.f32 %v1118, %v1130
    %v1135 = vadd.f32 %v1119, %v1131
    %v1136 = vadd.f32 %v1120, %v1132
    %1137 = vrot.lane.b32.xlu0 %v972, 15
    %v1138 = vpop.permute.xlu0 %1137
    %1139 = vrot.lane.b32.xlu0 %v974, 15
    %v1140 = vpop.permute.xlu0 %1139
    %1141 = vrot.lane.b32.xlu0 %v973, 15
    %v1142 = vpop.permute.xlu0 %1141
    %1143 = vrot.lane.b32.xlu0 %v975, 15
    %v1144 = vpop.permute.xlu0 %1143
    %v1145 = vsel %vm319, %v1138, %v1142
    %v1146 = vsel %vm319, %v1140, %v1144
    %v1147 = vsel %vm319, %v1142, %v1138
    %v1148 = vsel %vm319, %v1144, %v1140
    %v1149 = vsel %vm326, %v1147, 0.0
    %v1150 = vsel %vm327, %v1145, 0.0
    %v1151 = vsel %vm326, %v1148, 0.0
    %v1152 = vsel %vm327, %v1146, 0.0
    %1153 = vset.pattern.permute.xlu0 2
    %1154 = vperm.xlu0 %1153, %v61
    %v1155 = vpop.permute.xlu0 %1154
    %v1157 = vperm.slane %v1149, 0
    %v1158 = vperm.slane %v1150, 0
    %v1159 = vperm.slane %v1151, 0
    %v1160 = vperm.slane %v1152, 0
    %v1161 = vmul.f32 %v1155, %v1157
    %v1162 = vmul.f32 %v1155, %v1158
    %v1163 = vmul.f32 %v1155, %v1159
    %v1164 = vmul.f32 %v1155, %v1160
    %v1165 = vadd.f32 %v1133, %v1161
    %v1166 = vadd.f32 %v1134, %v1162
    %v1167 = vadd.f32 %v1135, %v1163
    %v1168 = vadd.f32 %v1136, %v1164
    %1169 = vset.pattern.permute.xlu0 11
    %1170 = vperm.xlu0 %1169, %v61
    %v1171 = vpop.permute.xlu0 %1170
    %v1173 = vperm.slane %v1149, 1
    %v1174 = vperm.slane %v1150, 1
    %v1175 = vperm.slane %v1151, 1
    %v1176 = vperm.slane %v1152, 1
    %v1177 = vmul.f32 %v1171, %v1173
    %v1178 = vmul.f32 %v1171, %v1174
    %v1179 = vmul.f32 %v1171, %v1175
    %v1180 = vmul.f32 %v1171, %v1176
    %v1181 = vadd.f32 %v1165, %v1177
    %v1182 = vadd.f32 %v1166, %v1178
    %v1183 = vadd.f32 %v1167, %v1179
    %v1184 = vadd.f32 %v1168, %v1180
    %1185 = vset.pattern.permute.xlu0 20
    %1186 = vperm.xlu0 %1185, %v61
    %v1187 = vpop.permute.xlu0 %1186
    %v1189 = vperm.slane %v1149, 2
    %v1190 = vperm.slane %v1150, 2
    %v1191 = vperm.slane %v1151, 2
    %v1192 = vperm.slane %v1152, 2
    %v1193 = vmul.f32 %v1187, %v1189
    %v1194 = vmul.f32 %v1187, %v1190
    %v1195 = vmul.f32 %v1187, %v1191
    %v1196 = vmul.f32 %v1187, %v1192
    %v1197 = vadd.f32 %v1181, %v1193
    %v1198 = vadd.f32 %v1182, %v1194
    %v1199 = vadd.f32 %v1183, %v1195
    %v1200 = vadd.f32 %v1184, %v1196
    %1201 = vset.pattern.permute.xlu0 29
    %1202 = vperm.xlu0 %1201, %v61
    %v1203 = vpop.permute.xlu0 %1202
    %v1205 = vperm.slane %v1149, 3
    %v1206 = vperm.slane %v1150, 3
    %v1207 = vperm.slane %v1151, 3
    %v1208 = vperm.slane %v1152, 3
    %v1209 = vmul.f32 %v1203, %v1205
    %v1210 = vmul.f32 %v1203, %v1206
    %v1211 = vmul.f32 %v1203, %v1207
    %v1212 = vmul.f32 %v1203, %v1208
    %v1213 = vadd.f32 %v1197, %v1209
    %v1214 = vadd.f32 %v1198, %v1210
    %v1215 = vadd.f32 %v1199, %v1211
    %v1216 = vadd.f32 %v1200, %v1212
    %1217 = vrot.lane.b32.xlu0 %v972, 1
    %v1218 = vpop.permute.xlu0 %1217
    %1219 = vrot.lane.b32.xlu0 %v974, 1
    %v1220 = vpop.permute.xlu0 %1219
    %1221 = vrot.lane.b32.xlu0 %v973, 1
    %v1222 = vpop.permute.xlu0 %1221
    %1223 = vrot.lane.b32.xlu0 %v975, 1
    %v1224 = vpop.permute.xlu0 %1223
    %v1225 = vsel %vm415, %v1218, %v1222
    %v1226 = vsel %vm415, %v1220, %v1224
    %v1227 = vsel %vm415, %v1222, %v1218
    %v1228 = vsel %vm415, %v1224, %v1220
    %v1229 = vsel %vm422, %v1227, 0.0
    %v1230 = vsel %vm423, %v1225, 0.0
    %v1231 = vsel %vm422, %v1228, 0.0
    %v1232 = vsel %vm423, %v1226, 0.0
    %1233 = vset.pattern.permute.xlu0 3
    %1234 = vperm.xlu0 %1233, %v61
    %v1235 = vpop.permute.xlu0 %1234
    %v1237 = vperm.slane %v1229, 0
    %v1238 = vperm.slane %v1230, 0
    %v1239 = vperm.slane %v1231, 0
    %v1240 = vperm.slane %v1232, 0
    %v1241 = vmul.f32 %v1235, %v1237
    %v1242 = vmul.f32 %v1235, %v1238
    %v1243 = vmul.f32 %v1235, %v1239
    %v1244 = vmul.f32 %v1235, %v1240
    %v1245 = vadd.f32 %v1213, %v1241
    %v1246 = vadd.f32 %v1214, %v1242
    %v1247 = vadd.f32 %v1215, %v1243
    %v1248 = vadd.f32 %v1216, %v1244
    %1249 = vset.pattern.permute.xlu0 12
    %1250 = vperm.xlu0 %1249, %v61
    %v1251 = vpop.permute.xlu0 %1250
    %v1253 = vperm.slane %v1229, 1
    %v1254 = vperm.slane %v1230, 1
    %v1255 = vperm.slane %v1231, 1
    %v1256 = vperm.slane %v1232, 1
    %v1257 = vmul.f32 %v1251, %v1253
    %v1258 = vmul.f32 %v1251, %v1254
    %v1259 = vmul.f32 %v1251, %v1255
    %v1260 = vmul.f32 %v1251, %v1256
    %v1261 = vadd.f32 %v1245, %v1257
    %v1262 = vadd.f32 %v1246, %v1258
    %v1263 = vadd.f32 %v1247, %v1259
    %v1264 = vadd.f32 %v1248, %v1260
    %1265 = vset.pattern.permute.xlu0 21
    %1266 = vperm.xlu0 %1265, %v61
    %v1267 = vpop.permute.xlu0 %1266
    %v1269 = vperm.slane %v1229, 2
    %v1270 = vperm.slane %v1230, 2
    %v1271 = vperm.slane %v1231, 2
    %v1272 = vperm.slane %v1232, 2
    %v1273 = vmul.f32 %v1267, %v1269
    %v1274 = vmul.f32 %v1267, %v1270
    %v1275 = vmul.f32 %v1267, %v1271
    %v1276 = vmul.f32 %v1267, %v1272
    %v1277 = vadd.f32 %v1261, %v1273
    %v1278 = vadd.f32 %v1262, %v1274
    %v1279 = vadd.f32 %v1263, %v1275
    %v1280 = vadd.f32 %v1264, %v1276
    %1281 = vset.pattern.permute.xlu0 30
    %1282 = vperm.xlu0 %1281, %v61
    %v1283 = vpop.permute.xlu0 %1282
    %v1285 = vperm.slane %v1229, 3
    %v1286 = vperm.slane %v1230, 3
    %v1287 = vperm.slane %v1231, 3
    %v1288 = vperm.slane %v1232, 3
    %v1289 = vmul.f32 %v1283, %v1285
    %v1290 = vmul.f32 %v1283, %v1286
    %v1291 = vmul.f32 %v1283, %v1287
    %v1292 = vmul.f32 %v1283, %v1288
    %v1293 = vadd.f32 %v1277, %v1289
    %v1294 = vadd.f32 %v1278, %v1290
    %v1295 = vadd.f32 %v1279, %v1291
    %v1296 = vadd.f32 %v1280, %v1292
    %1297 = vset.pattern.permute.xlu0 4
    %1298 = vperm.xlu0 %1297, %v61
    %v1299 = vpop.permute.xlu0 %1298
    %v1301 = vperm.slane %v972, 0
    %v1302 = vperm.slane %v973, 0
    %v1303 = vperm.slane %v974, 0
    %v1304 = vperm.slane %v975, 0
    %v1305 = vmul.f32 %v1299, %v1301
    %v1306 = vmul.f32 %v1299, %v1302
    %v1307 = vmul.f32 %v1299, %v1303
    %v1308 = vmul.f32 %v1299, %v1304
    %v1309 = vadd.f32 %v1293, %v1305
    %v1310 = vadd.f32 %v1294, %v1306
    %v1311 = vadd.f32 %v1295, %v1307
    %v1312 = vadd.f32 %v1296, %v1308
    %1313 = vset.pattern.permute.xlu0 13
    %1314 = vperm.xlu0 %1313, %v61
    %v1315 = vpop.permute.xlu0 %1314
    %v1317 = vperm.slane %v972, 1
    %v1318 = vperm.slane %v973, 1
    %v1319 = vperm.slane %v974, 1
    %v1320 = vperm.slane %v975, 1
    %v1321 = vmul.f32 %v1315, %v1317
    %v1322 = vmul.f32 %v1315, %v1318
    %v1323 = vmul.f32 %v1315, %v1319
    %v1324 = vmul.f32 %v1315, %v1320
    %v1325 = vadd.f32 %v1309, %v1321
    %v1326 = vadd.f32 %v1310, %v1322
    %v1327 = vadd.f32 %v1311, %v1323
    %v1328 = vadd.f32 %v1312, %v1324
    %1329 = vset.pattern.permute.xlu0 22
    %1330 = vperm.xlu0 %1329, %v61
    %v1331 = vpop.permute.xlu0 %1330
    %v1333 = vperm.slane %v972, 2
    %v1334 = vperm.slane %v973, 2
    %v1335 = vperm.slane %v974, 2
    %v1336 = vperm.slane %v975, 2
    %v1337 = vmul.f32 %v1331, %v1333
    %v1338 = vmul.f32 %v1331, %v1334
    %v1339 = vmul.f32 %v1331, %v1335
    %v1340 = vmul.f32 %v1331, %v1336
    %v1341 = vadd.f32 %v1325, %v1337
    %v1342 = vadd.f32 %v1326, %v1338
    %v1343 = vadd.f32 %v1327, %v1339
    %v1344 = vadd.f32 %v1328, %v1340
    %1345 = vset.pattern.permute.xlu0 31
    %1346 = vperm.xlu0 %1345, %v61
    %v1347 = vpop.permute.xlu0 %1346
    %v1349 = vperm.slane %v972, 3
    %v1350 = vperm.slane %v973, 3
    %v1351 = vperm.slane %v974, 3
    %v1352 = vperm.slane %v975, 3
    %v1353 = vmul.f32 %v1347, %v1349
    %v1354 = vmul.f32 %v1347, %v1350
    %v1355 = vmul.f32 %v1347, %v1351
    %v1356 = vmul.f32 %v1347, %v1352
    %v1357 = vadd.f32 %v1341, %v1353
    %v1358 = vadd.f32 %v1342, %v1354
    %v1359 = vadd.f32 %v1343, %v1355
    %v1360 = vadd.f32 %v1344, %v1356
    %1361 = vrot.lane.b32.xlu0 %v972, 127
    %v1362 = vpop.permute.xlu0 %1361
    %1363 = vrot.lane.b32.xlu0 %v974, 127
    %v1364 = vpop.permute.xlu0 %1363
    %1365 = vrot.lane.b32.xlu0 %v973, 127
    %v1366 = vpop.permute.xlu0 %1365
    %1367 = vrot.lane.b32.xlu0 %v975, 127
    %v1368 = vpop.permute.xlu0 %1367
    %v1369 = vsel %vm607, %v1362, %v1366
    %v1370 = vsel %vm607, %v1364, %v1368
    %v1371 = vsel %vm607, %v1366, %v1362
    %v1372 = vsel %vm607, %v1368, %v1364
    %v1373 = vsel %vm614, %v1369, 0.0
    %v1374 = vsel %vm615, %v1371, 0.0
    %v1375 = vsel %vm614, %v1370, 0.0
    %v1376 = vsel %vm615, %v1372, 0.0
    %1377 = vset.pattern.permute.xlu0 5
    %1378 = vperm.xlu0 %1377, %v61
    %v1379 = vpop.permute.xlu0 %1378
    %v1381 = vperm.slane %v1373, 0
    %v1382 = vperm.slane %v1374, 0
    %v1383 = vperm.slane %v1375, 0
    %v1384 = vperm.slane %v1376, 0
    %v1385 = vmul.f32 %v1379, %v1381
    %v1386 = vmul.f32 %v1379, %v1382
    %v1387 = vmul.f32 %v1379, %v1383
    %v1388 = vmul.f32 %v1379, %v1384
    %v1389 = vadd.f32 %v1357, %v1385
    %v1390 = vadd.f32 %v1358, %v1386
    %v1391 = vadd.f32 %v1359, %v1387
    %v1392 = vadd.f32 %v1360, %v1388
    %1393 = vset.pattern.permute.xlu0 14
    %1394 = vperm.xlu0 %1393, %v61
    %v1395 = vpop.permute.xlu0 %1394
    %v1397 = vperm.slane %v1373, 1
    %v1398 = vperm.slane %v1374, 1
    %v1399 = vperm.slane %v1375, 1
    %v1400 = vperm.slane %v1376, 1
    %v1401 = vmul.f32 %v1395, %v1397
    %v1402 = vmul.f32 %v1395, %v1398
    %v1403 = vmul.f32 %v1395, %v1399
    %v1404 = vmul.f32 %v1395, %v1400
    %v1405 = vadd.f32 %v1389, %v1401
    %v1406 = vadd.f32 %v1390, %v1402
    %v1407 = vadd.f32 %v1391, %v1403
    %v1408 = vadd.f32 %v1392, %v1404
    %1409 = vset.pattern.permute.xlu0 23
    %1410 = vperm.xlu0 %1409, %v61
    %v1411 = vpop.permute.xlu0 %1410
    %v1413 = vperm.slane %v1373, 2
    %v1414 = vperm.slane %v1374, 2
    %v1415 = vperm.slane %v1375, 2
    %v1416 = vperm.slane %v1376, 2
    %v1417 = vmul.f32 %v1411, %v1413
    %v1418 = vmul.f32 %v1411, %v1414
    %v1419 = vmul.f32 %v1411, %v1415
    %v1420 = vmul.f32 %v1411, %v1416
    %v1421 = vadd.f32 %v1405, %v1417
    %v1422 = vadd.f32 %v1406, %v1418
    %v1423 = vadd.f32 %v1407, %v1419
    %v1424 = vadd.f32 %v1408, %v1420
    %1425 = vset.pattern.permute.xlu0 32
    %1426 = vperm.xlu0 %1425, %v61
    %v1427 = vpop.permute.xlu0 %1426
    %v1429 = vperm.slane %v1373, 3
    %v1430 = vperm.slane %v1374, 3
    %v1431 = vperm.slane %v1375, 3
    %v1432 = vperm.slane %v1376, 3
    %v1433 = vmul.f32 %v1427, %v1429
    %v1434 = vmul.f32 %v1427, %v1430
    %v1435 = vmul.f32 %v1427, %v1431
    %v1436 = vmul.f32 %v1427, %v1432
    %v1437 = vadd.f32 %v1421, %v1433
    %v1438 = vadd.f32 %v1422, %v1434
    %v1439 = vadd.f32 %v1423, %v1435
    %v1440 = vadd.f32 %v1424, %v1436
    %1441 = vrot.lane.b32.xlu0 %v972, 113
    %v1442 = vpop.permute.xlu0 %1441
    %1443 = vrot.lane.b32.xlu0 %v974, 113
    %v1444 = vpop.permute.xlu0 %1443
    %1445 = vrot.lane.b32.xlu0 %v973, 113
    %v1446 = vpop.permute.xlu0 %1445
    %1447 = vrot.lane.b32.xlu0 %v975, 113
    %v1448 = vpop.permute.xlu0 %1447
    %v1449 = vsel %vm703, %v1442, %v1446
    %v1450 = vsel %vm703, %v1444, %v1448
    %v1451 = vsel %vm703, %v1446, %v1442
    %v1452 = vsel %vm703, %v1448, %v1444
    %v1453 = vsel %vm710, %v1449, 0.0
    %v1454 = vsel %vm711, %v1451, 0.0
    %v1455 = vsel %vm710, %v1450, 0.0
    %v1456 = vsel %vm711, %v1452, 0.0
    %1457 = vset.pattern.permute.xlu0 6
    %1458 = vperm.xlu0 %1457, %v61
    %v1459 = vpop.permute.xlu0 %1458
    %v1461 = vperm.slane %v1453, 0
    %v1462 = vperm.slane %v1454, 0
    %v1463 = vperm.slane %v1455, 0
    %v1464 = vperm.slane %v1456, 0
    %v1465 = vmul.f32 %v1459, %v1461
    %v1466 = vmul.f32 %v1459, %v1462
    %v1467 = vmul.f32 %v1459, %v1463
    %v1468 = vmul.f32 %v1459, %v1464
    %v1469 = vadd.f32 %v1437, %v1465
    %v1470 = vadd.f32 %v1438, %v1466
    %v1471 = vadd.f32 %v1439, %v1467
    %v1472 = vadd.f32 %v1440, %v1468
    %1473 = vset.pattern.permute.xlu0 15
    %1474 = vperm.xlu0 %1473, %v61
    %v1475 = vpop.permute.xlu0 %1474
    %v1477 = vperm.slane %v1453, 1
    %v1478 = vperm.slane %v1454, 1
    %v1479 = vperm.slane %v1455, 1
    %v1480 = vperm.slane %v1456, 1
    %v1481 = vmul.f32 %v1475, %v1477
    %v1482 = vmul.f32 %v1475, %v1478
    %v1483 = vmul.f32 %v1475, %v1479
    %v1484 = vmul.f32 %v1475, %v1480
    %v1485 = vadd.f32 %v1469, %v1481
    %v1486 = vadd.f32 %v1470, %v1482
    %v1487 = vadd.f32 %v1471, %v1483
    %v1488 = vadd.f32 %v1472, %v1484
    %1489 = vset.pattern.permute.xlu0 24
    %1490 = vperm.xlu0 %1489, %v61
    %v1491 = vpop.permute.xlu0 %1490
    %v1493 = vperm.slane %v1453, 2
    %v1494 = vperm.slane %v1454, 2
    %v1495 = vperm.slane %v1455, 2
    %v1496 = vperm.slane %v1456, 2
    %v1497 = vmul.f32 %v1491, %v1493
    %v1498 = vmul.f32 %v1491, %v1494
    %v1499 = vmul.f32 %v1491, %v1495
    %v1500 = vmul.f32 %v1491, %v1496
    %v1501 = vadd.f32 %v1485, %v1497
    %v1502 = vadd.f32 %v1486, %v1498
    %v1503 = vadd.f32 %v1487, %v1499
    %v1504 = vadd.f32 %v1488, %v1500
    %1505 = vset.pattern.permute.xlu0 33
    %1506 = vperm.xlu0 %1505, %v61
    %v1507 = vpop.permute.xlu0 %1506
    %v1509 = vperm.slane %v1453, 3
    %v1510 = vperm.slane %v1454, 3
    %v1511 = vperm.slane %v1455, 3
    %v1512 = vperm.slane %v1456, 3
    %v1513 = vmul.f32 %v1507, %v1509
    %v1514 = vmul.f32 %v1507, %v1510
    %v1515 = vmul.f32 %v1507, %v1511
    %v1516 = vmul.f32 %v1507, %v1512
    %v1517 = vadd.f32 %v1501, %v1513
    %v1518 = vadd.f32 %v1502, %v1514
    %v1519 = vadd.f32 %v1503, %v1515
    %v1520 = vadd.f32 %v1504, %v1516
    %1521 = vrot.lane.b32.xlu0 %v972, 112
    %v1522 = vpop.permute.xlu0 %1521
    %1523 = vrot.lane.b32.xlu0 %v974, 112
    %v1524 = vpop.permute.xlu0 %1523
    %1525 = vrot.lane.b32.xlu0 %v973, 112
    %v1526 = vpop.permute.xlu0 %1525
    %1527 = vrot.lane.b32.xlu0 %v975, 112
    %v1528 = vpop.permute.xlu0 %1527
    %v1529 = vsel %vm799, %v1522, %v1526
    %v1530 = vsel %vm799, %v1524, %v1528
    %v1531 = vsel %vm799, %v1526, %v1522
    %v1532 = vsel %vm799, %v1528, %v1524
    %v1533 = vsel %vm806, %v1529, 0.0
    %v1534 = vsel %vm807, %v1531, 0.0
    %v1535 = vsel %vm806, %v1530, 0.0
    %v1536 = vsel %vm807, %v1532, 0.0
    %1537 = vset.pattern.permute.xlu0 7
    %1538 = vperm.xlu0 %1537, %v61
    %v1539 = vpop.permute.xlu0 %1538
    %v1541 = vperm.slane %v1533, 0
    %v1542 = vperm.slane %v1534, 0
    %v1543 = vperm.slane %v1535, 0
    %v1544 = vperm.slane %v1536, 0
    %v1545 = vmul.f32 %v1539, %v1541
    %v1546 = vmul.f32 %v1539, %v1542
    %v1547 = vmul.f32 %v1539, %v1543
    %v1548 = vmul.f32 %v1539, %v1544
    %v1549 = vadd.f32 %v1517, %v1545
    %v1550 = vadd.f32 %v1518, %v1546
    %v1551 = vadd.f32 %v1519, %v1547
    %v1552 = vadd.f32 %v1520, %v1548
    %1553 = vset.pattern.permute.xlu0 16
    %1554 = vperm.xlu0 %1553, %v61
    %v1555 = vpop.permute.xlu0 %1554
    %v1557 = vperm.slane %v1533, 1
    %v1558 = vperm.slane %v1534, 1
    %v1559 = vperm.slane %v1535, 1
    %v1560 = vperm.slane %v1536, 1
    %v1561 = vmul.f32 %v1555, %v1557
    %v1562 = vmul.f32 %v1555, %v1558
    %v1563 = vmul.f32 %v1555, %v1559
    %v1564 = vmul.f32 %v1555, %v1560
    %v1565 = vadd.f32 %v1549, %v1561
    %v1566 = vadd.f32 %v1550, %v1562
    %v1567 = vadd.f32 %v1551, %v1563
    %v1568 = vadd.f32 %v1552, %v1564
    %1569 = vset.pattern.permute.xlu0 25
    %1570 = vperm.xlu0 %1569, %v61
    %v1571 = vpop.permute.xlu0 %1570
    %v1573 = vperm.slane %v1533, 2
    %v1574 = vperm.slane %v1534, 2
    %v1575 = vperm.slane %v1535, 2
    %v1576 = vperm.slane %v1536, 2
    %v1577 = vmul.f32 %v1571, %v1573
    %v1578 = vmul.f32 %v1571, %v1574
    %v1579 = vmul.f32 %v1571, %v1575
    %v1580 = vmul.f32 %v1571, %v1576
    %v1581 = vadd.f32 %v1565, %v1577
    %v1582 = vadd.f32 %v1566, %v1578
    %v1583 = vadd.f32 %v1567, %v1579
    %v1584 = vadd.f32 %v1568, %v1580
    %1585 = vset.pattern.permute.xlu0 34
    %1586 = vperm.xlu0 %1585, %v61
    %v1587 = vpop.permute.xlu0 %1586
    %v1589 = vperm.slane %v1533, 3
    %v1590 = vperm.slane %v1534, 3
    %v1591 = vperm.slane %v1535, 3
    %v1592 = vperm.slane %v1536, 3
    %v1593 = vmul.f32 %v1587, %v1589
    %v1594 = vmul.f32 %v1587, %v1590
    %v1595 = vmul.f32 %v1587, %v1591
    %v1596 = vmul.f32 %v1587, %v1592
    %v1597 = vadd.f32 %v1581, %v1593
    %v1598 = vadd.f32 %v1582, %v1594
    %v1599 = vadd.f32 %v1583, %v1595
    %v1600 = vadd.f32 %v1584, %v1596
    %1601 = vrot.lane.b32.xlu0 %v972, 111
    %v1602 = vpop.permute.xlu0 %1601
    %1603 = vrot.lane.b32.xlu0 %v974, 111
    %v1604 = vpop.permute.xlu0 %1603
    %1605 = vrot.lane.b32.xlu0 %v973, 111
    %v1606 = vpop.permute.xlu0 %1605
    %1607 = vrot.lane.b32.xlu0 %v975, 111
    %v1608 = vpop.permute.xlu0 %1607
    %v1609 = vsel %vm895, %v1602, %v1606
    %v1610 = vsel %vm895, %v1604, %v1608
    %v1611 = vsel %vm895, %v1606, %v1602
    %v1612 = vsel %vm895, %v1608, %v1604
    %v1613 = vsel %vm902, %v1609, 0.0
    %v1614 = vsel %vm903, %v1611, 0.0
    %v1615 = vsel %vm902, %v1610, 0.0
    %v1616 = vsel %vm903, %v1612, 0.0
    %1617 = vset.pattern.permute.xlu0 8
    %1618 = vperm.xlu0 %1617, %v61
    %v1619 = vpop.permute.xlu0 %1618
    %v1621 = vperm.slane %v1613, 0
    %v1622 = vperm.slane %v1614, 0
    %v1623 = vperm.slane %v1615, 0
    %v1624 = vperm.slane %v1616, 0
    %v1625 = vmul.f32 %v1619, %v1621
    %v1626 = vmul.f32 %v1619, %v1622
    %v1627 = vmul.f32 %v1619, %v1623
    %v1628 = vmul.f32 %v1619, %v1624
    %v1629 = vadd.f32 %v1597, %v1625
    %v1630 = vadd.f32 %v1598, %v1626
    %v1631 = vadd.f32 %v1599, %v1627
    %v1632 = vadd.f32 %v1600, %v1628
    %1633 = vset.pattern.permute.xlu0 17
    %1634 = vperm.xlu0 %1633, %v61
    %v1635 = vpop.permute.xlu0 %1634
    %v1637 = vperm.slane %v1613, 1
    %v1638 = vperm.slane %v1614, 1
    %v1639 = vperm.slane %v1615, 1
    %v1640 = vperm.slane %v1616, 1
    %v1641 = vmul.f32 %v1635, %v1637
    %v1642 = vmul.f32 %v1635, %v1638
    %v1643 = vmul.f32 %v1635, %v1639
    %v1644 = vmul.f32 %v1635, %v1640
    %v1645 = vadd.f32 %v1629, %v1641
    %v1646 = vadd.f32 %v1630, %v1642
    %v1647 = vadd.f32 %v1631, %v1643
    %v1648 = vadd.f32 %v1632, %v1644
    %1649 = vset.pattern.permute.xlu0 26
    %1650 = vperm.xlu0 %1649, %v61
    %v1651 = vpop.permute.xlu0 %1650
    %v1653 = vperm.slane %v1613, 2
    %v1654 = vperm.slane %v1614, 2
    %v1655 = vperm.slane %v1615, 2
    %v1656 = vperm.slane %v1616, 2
    %v1657 = vmul.f32 %v1651, %v1653
    %v1658 = vmul.f32 %v1651, %v1654
    %v1659 = vmul.f32 %v1651, %v1655
    %v1660 = vmul.f32 %v1651, %v1656
    %v1661 = vadd.f32 %v1645, %v1657
    %v1662 = vadd.f32 %v1646, %v1658
    %v1663 = vadd.f32 %v1647, %v1659
    %v1664 = vadd.f32 %v1648, %v1660
    %1665 = vset.pattern.permute.xlu0 35
    %1666 = vperm.xlu0 %1665, %v61
    %v1667 = vpop.permute.xlu0 %1666
    %v1669 = vperm.slane %v1613, 3
    %v1670 = vperm.slane %v1614, 3
    %v1671 = vperm.slane %v1615, 3
    %v1672 = vperm.slane %v1616, 3
    %v1673 = vmul.f32 %v1667, %v1669
    %v1674 = vmul.f32 %v1667, %v1670
    %v1675 = vmul.f32 %v1667, %v1671
    %v1676 = vmul.f32 %v1667, %v1672
    %v1677 = vadd.f32 %v1661, %v1673
    %v1678 = vadd.f32 %v1662, %v1674
    %v1679 = vadd.f32 %v1663, %v1675
    %v1680 = vadd.f32 %v1664, %v1676
    %1681 = vst [vmem:[#allocation1] ss:$2 sm:$0xff] %v58
    %v1682 = vld.sshfl [vmem:[#allocation1] sm:$0xff pattern:$0x75316420]
    %v1683 = vld.sshfl [vmem:[#allocation1 + $0x8] sm:$0xff pattern:$0x75316420]
    %s1684 = scalar_lea.vmem [#allocation1], 16
    %1685 = vst [vmem:[%s1684] ss:$2 sm:$0xff] %v59
    %v1686 = vld.sshfl [vmem:[#allocation1 + $0x10] sm:$0xff pattern:$0x75316420]
    %v1687 = vld.sshfl [vmem:[#allocation1 + $0x18] sm:$0xff pattern:$0x75316420]
    %v1692 = vadd.f32 %v1677, %v1682
    %v1693 = vadd.f32 %v1678, %v1683
    %v1694 = vadd.f32 %v1679, %v1686
    %v1695 = vadd.f32 %v1680, %v1687
    %v1696 = vmax.f32 %v1692, 0.0
    %v1697 = vmax.f32 %v1693, 0.0
    %v1698 = vmax.f32 %v1694, 0.0
    %v1699 = vmax.f32 %v1695, 0.0
    %v1704 = vrot.slane %v1697, 4
    %v1705 = vrot.slane %v1699, 4
    %vm1706 = vcmask 1043456
    %v1707 = vsel %vm1706, %v1696, %v1704
    %v1708 = vsel %vm1706, %v1698, %v1705
    %1711 = vst [vmem:[#allocation8] sm:$0xff] %v1707
    %1712 = vst [vmem:[#allocation8 + $0x8] sm:$0xff] %v1708
    // Predicated region
    $region26: #{tpu_custom_call.1} parent=1 // pred_check
      _
    $region27: #{tpu_custom_call.1} parent=1 // pred_check_branch
      %1714 = sbr.rel (0) target = $region29
    $region28: #{tpu_custom_call.1} parent=1 // pred_region
      %1716 = vsyncadd [#allocation4], 0
      %s1717 = sshll.u32 [#allocation8], 4
      %s1718 = int_to_ptr.vmem [resolvable:$true] %s1717
      %s1719 = sshll.u32 %s3, 4
      %s1720 = int_to_ptr.hbm [resolvable:$true] %s1719
      %1725 = dma.vmem_to_hbm [thread:$0]  %s1718, 256, %s1720, [#allocation4], 128, 128, 8
    $region29: #{tpu_custom_call.1} parent=1 // pred_fallthru
      _
    // Predicated region
    $region30: #{tpu_custom_call.1} parent=1 // pred_check
      _
    $region31: #{tpu_custom_call.1} parent=1 // pred_check_branch
      %1727 = sbr.rel (0) target = $region33
    $region32: #{tpu_custom_call.1} parent=1 // pred_region
      %1729 = dma.done [#allocation4], 256
    $region33: #{tpu_custom_call.1} parent=1 // pred_fallthru
      _
    %1730 = vsyncpa [#allocation3], 1
    %1731 = vsyncpa [#allocation6], 1
    %1732 = vsyncpa [#allocation4], 1

</llo_original>
